<compile_context>
chip_gen: v5e
topology: v5e:2x2
jax: 0.10.0
libtpu: 0.0.40
codegen_flags: <defaults>
</compile_context>

<pallas_src>
import jax
import jax.numpy as jnp
from jax import lax
from jax.experimental import pallas as pl
from jax.experimental.pallas import tpu as pltpu

# ----------------------- model sizes (small, deterministic) -----------------------
VOCAB_SIZE   = 50
EMBED_SIZE   = 16
RNN_HIDDEN   = 32
NUM_CLASSES  = 4
BRANCH_HID   = 128
BN_EPS       = 1e-5
BATCH        = 2
SEQ_LEN      = 8

SUBLANE = 8       # f32 sublane tile
LANE    = 128     # lane width


# ------------------------------- Pallas kernel ------------------------------------
def escort_kernel(embeds_ref,                              # (T*Bp, E) time-major flattened
                  w_ir_ref, w_iz_ref, w_in_ref,            # (E, H) each
                  w_hr_ref, w_hz_ref, w_hn_ref,            # (H, H) each
                  b_r_ref, b_z_ref, b_in_ref, b_hn_ref,    # (1, H) each
                  w1_ref, b1_ref,                          # (H, 128), (1, 128)  BN folded in
                  w2_ref, b2_ref,                          # (128, 128), (1, 128) col-padded
                  out_ref):                                # (Bp, 128) lane-dense
    Bp = out_ref.shape[0]
    T = embeds_ref.shape[0] // Bp

    x = embeds_ref[...]                                    # (T*Bp, E)

    # Input-side gate projections for every timestep at once; one full-tile MXU matmul per
    # gate, output layout already lane-major-last -> no relayout/transpose in the kernel.
    gx_r = jnp.dot(x, w_ir_ref[...], preferred_element_type=jnp.float32) + b_r_ref[...]
    gx_z = jnp.dot(x, w_iz_ref[...], preferred_element_type=jnp.float32) + b_z_ref[...]
    gx_n = jnp.dot(x, w_in_ref[...], preferred_element_type=jnp.float32) + b_in_ref[...]

    w_hr = w_hr_ref[...]
    w_hz = w_hz_ref[...]
    w_hn = w_hn_ref[...]
    b_hn = b_hn_ref[...]

    # PyTorch GRU cell (gate order r|z|n):
    #   r = sigmoid(W_ir x + b_ir + W_hr h + b_hr)
    #   z = sigmoid(W_iz x + b_iz + W_hz h + b_hz)
    #   n = tanh  (W_in x + b_in + r * (W_hn h + b_hn))
    #   h = (1 - z) * n + z * h
    # Static unroll over T (T=8 is static, live data is a few KiB, so register/VMEM pressure
    # from unrolling is a non-issue). All row slices are static and sublane-aligned (Bp % 8 == 0).
    h = jnp.zeros((Bp, w_hr.shape[0]), jnp.float32)
    for t in range(T):
        lo = t * Bp
        gh_r = jnp.dot(h, w_hr, preferred_element_type=jnp.float32)
        gh_z = jnp.dot(h, w_hz, preferred_element_type=jnp.float32)
        gh_n = jnp.dot(h, w_hn, preferred_element_type=jnp.float32)
        r = jax.nn.sigmoid(gx_r[lo:lo + Bp, :] + gh_r)
        z = jax.nn.sigmoid(gx_z[lo:lo + Bp, :] + gh_z)
        n = jnp.tanh(gx_n[lo:lo + Bp, :] + r * (gh_n + b_hn))
        h = (1.0 - z) * n + z * h

    # Branch: dense1 (BatchNorm folded in) -> dropout (identity, eval) -> dense2 -> sigmoid.
    d1 = jnp.dot(h, w1_ref[...], preferred_element_type=jnp.float32) + b1_ref[...]
    d2 = jnp.dot(d1, w2_ref[...], preferred_element_type=jnp.float32) + b2_ref[...]
    out_ref[...] = jax.nn.sigmoid(d2)                      # full (Bp, 128) unmasked store


# --------------------------- parameter preparation ---------------------------------
def prepare_params(params):
    """Rewrites PyTorch-layout params into the kernel layout (per-gate splits, pre-summed
    biases, BN folded into dense1, dense2 padded to lane width)."""
    H = RNN_HIDDEN
    w_ih, w_hh = params['w_ih_t'], params['w_hh_t']        # (E, 3H), (H, 3H)
    b_ih, b_hh = params['b_ih'], params['b_hh']            # (1, 3H), (1, 3H)

    kp = dict(
        w_ir=w_ih[:, 0 * H:1 * H], w_iz=w_ih[:, 1 * H:2 * H], w_in=w_ih[:, 2 * H:3 * H],
        w_hr=w_hh[:, 0 * H:1 * H], w_hz=w_hh[:, 1 * H:2 * H], w_hn=w_hh[:, 2 * H:3 * H],
        # r/z biases pre-summed; n gate keeps b_in (outside r*) and b_hn (inside r*) separate.
        b_r=b_ih[:, 0 * H:1 * H] + b_hh[:, 0 * H:1 * H],
        b_z=b_ih[:, 1 * H:2 * H] + b_hh[:, 1 * H:2 * H],
        b_in=b_ih[:, 2 * H:3 * H],
        b_hn=b_hh[:, 2 * H:3 * H],
    )

    # Fold eval-mode BatchNorm1d into dense1:  y = ((x@W1 + b1) - mean) * scale + beta
    #   => x @ (W1*scale) + ((b1 - mean)*scale + beta)
    scale = params['gamma'] * lax.rsqrt(params['running_var'] + BN_EPS)   # (1, 128)
    kp['w1'] = params['w1_t'] * scale
    kp['b1'] = (params['b1'] - params['running_mean']) * scale + params['beta']

    # Pad dense2 to (128, 128)/(1, 128) so the kernel output tile is lane-dense.
    kp['w2'] = jnp.zeros((BRANCH_HID, LANE), jnp.float32).at[:, :NUM_CLASSES].set(params['w2_t'])
    kp['b2'] = jnp.zeros((1, LANE), jnp.float32).at[:, :NUM_CLASSES].set(params['b2'])
    return kp


# --------------------------------- wrapper ----------------------------------------
def escort_forward(sequence, params):
    kp = prepare_params(params)
    B, T = sequence.shape
    Bp = pl.cdiv(B, SUBLANE) * SUBLANE                     # pad batch to a full sublane group

    # Embedding lookup (gather) + time-major layout + batch pad + flatten, all as one XLA
    # fusion on the wrapper side. padding_idx=0 row is zeroed at init.
    embeds = jnp.take(params['embedding'], sequence, axis=0).astype(jnp.float32)  # (B, T, E)
    embeds = jnp.transpose(embeds, (1, 0, 2))                                      # (T, B, E)
    embeds = jnp.pad(embeds, ((0, 0), (0, Bp - B), (0, 0)))                        # (T, Bp, E)
    embeds = embeds.reshape(T * Bp, EMBED_SIZE)                                    # (T*Bp, E)
    # TODO(synk): fuse the embedding gather into the kernel itself (scalar-prefetch of
    # `sequence` + pl.Element row-gather BlockSpec on the table) if XLA dispatch overhead
    # for this tiny glue op ever matters.

    kernel_inputs = (
        embeds,
        kp['w_ir'], kp['w_iz'], kp['w_in'],
        kp['w_hr'], kp['w_hz'], kp['w_hn'],
        kp['b_r'], kp['b_z'], kp['b_in'], kp['b_hn'],
        kp['w1'], kp['b1'], kp['w2'], kp['b2'],
    )
    vmem = pl.BlockSpec(memory_space=pltpu.MemorySpace.VMEM)
    # Total operand footprint is a few KiB -> single grid-less invocation, full-array VMEM
    # blocks.  (If batch grows, add a grid axis over batch blocks of >=8 rows with
    # dimension_semantics=("parallel",) to shard across v7x's two TensorCores.)
    out_padded = pl.pallas_call(
        escort_kernel,
        out_shape=jax.ShapeDtypeStruct((Bp, LANE), jnp.float32),
        in_specs=[vmem] * len(kernel_inputs),
        out_specs=vmem,
    )(*kernel_inputs)
    return out_padded[:B, :NUM_CLASSES]


# --------------------------- pure-JAX reference (for checking) --------------------
def escort_reference(sequence, params):
    embeds = jnp.take(params['embedding'], sequence, axis=0).astype(jnp.float32)
    B, T, _ = embeds.shape
    H = RNN_HIDDEN
    gates_x = jnp.einsum('bte,eg->tbg', embeds, params['w_ih_t']) + params['b_ih']
    h = jnp.zeros((B, H), jnp.float32)
    for t in range(T):
        gx = gates_x[t]
        gh = h @ params['w_hh_t'] + params['b_hh']
        r = jax.nn.sigmoid(gx[:, :H] + gh[:, :H])
        z = jax.nn.sigmoid(gx[:, H:2 * H] + gh[:, H:2 * H])
        n = jnp.tanh(gx[:, 2 * H:] + r * gh[:, 2 * H:])
        h = (1.0 - z) * n + z * h
    d1 = h @ params['w1_t'] + params['b1']
    bn = (d1 - params['running_mean']) * lax.rsqrt(params['running_var'] + BN_EPS) \
         * params['gamma'] + params['beta']
    d2 = bn @ params['w2_t'] + params['b2']
    return jax.nn.sigmoid(d2)


# ------------------------------- param init ---------------------------------------
def init_params(key):
    ks = jax.random.split(key, 12)
    H, E, C, BH = RNN_HIDDEN, EMBED_SIZE, NUM_CLASSES, BRANCH_HID

    emb = 0.1 * jax.random.normal(ks[0], (VOCAB_SIZE, E), jnp.float32)
    emb = emb.at[0].set(0.0)  # padding_idx=0

    params = dict(
        embedding=emb,
        # GRU params stored pre-transposed (in, out) for `x @ W`; gate order [r|z|n].
        w_ih_t=0.1 * jax.random.normal(ks[1], (E, 3 * H), jnp.float32),
        b_ih=0.1 * jax.random.normal(ks[2], (1, 3 * H), jnp.float32),
        w_hh_t=0.1 * jax.random.normal(ks[3], (H, 3 * H), jnp.float32),
        b_hh=0.1 * jax.random.normal(ks[4], (1, 3 * H), jnp.float32),
        # Branch.dense1 (H -> 128)
        w1_t=0.1 * jax.random.normal(ks[5], (H, BH), jnp.float32),
        b1=0.1 * jax.random.normal(ks[6], (1, BH), jnp.float32),
        # Branch.batchnorm1 (eval-mode: running stats + affine)
        gamma=1.0 + 0.05 * jax.random.normal(ks[7], (1, BH), jnp.float32),
        beta=0.05 * jax.random.normal(ks[8], (1, BH), jnp.float32),
        running_mean=jnp.zeros((1, BH), jnp.float32),
        running_var=jnp.ones((1, BH), jnp.float32),
        # Branch.dense2 (128 -> num_classes)
        w2_t=0.1 * jax.random.normal(ks[9], (BH, C), jnp.float32),
        b2=0.1 * jax.random.normal(ks[10], (1, C), jnp.float32),
    )
    return params


# ---------------------------------- main -------------------------------------------
if __name__ == "__main__":
    key = jax.random.PRNGKey(0)
    pkey, skey = jax.random.split(key)
    params = init_params(pkey)

    # token ids in [0, VOCAB_SIZE); force a couple of padding tokens (id 0)
    sequence = jax.random.randint(skey, (BATCH, SEQ_LEN), 0, VOCAB_SIZE, dtype=jnp.int32)
    sequence = sequence.at[:, -1].set(0)

    out = escort_forward(sequence, params)
    out = jax.block_until_ready(out)

    ref = escort_reference(sequence, params)
    assert out.shape == (BATCH, NUM_CLASSES)
    assert bool(jnp.all(jnp.isfinite(out)))
    assert bool(jnp.allclose(out, ref, atol=1e-4, rtol=1e-4)), (out, ref)

    print("KERNEL_OK")
</pallas_src>

<mosaic_0001>
module attributes {stable_mosaic.version = 11 : i64} {
  func.func @escort_kernel(%arg0: memref<64x16xf32, #tpu.memory_space<vmem>>, %arg1: memref<16x32xf32, #tpu.memory_space<vmem>>, %arg2: memref<16x32xf32, #tpu.memory_space<vmem>>, %arg3: memref<16x32xf32, #tpu.memory_space<vmem>>, %arg4: memref<32x32xf32, #tpu.memory_space<vmem>>, %arg5: memref<32x32xf32, #tpu.memory_space<vmem>>, %arg6: memref<32x32xf32, #tpu.memory_space<vmem>>, %arg7: memref<1x32xf32, #tpu.memory_space<vmem>>, %arg8: memref<1x32xf32, #tpu.memory_space<vmem>>, %arg9: memref<1x32xf32, #tpu.memory_space<vmem>>, %arg10: memref<1x32xf32, #tpu.memory_space<vmem>>, %arg11: memref<32x128xf32, #tpu.memory_space<vmem>>, %arg12: memref<1x128xf32, #tpu.memory_space<vmem>>, %arg13: memref<128x128xf32, #tpu.memory_space<vmem>>, %arg14: memref<1x128xf32, #tpu.memory_space<vmem>>, %arg15: memref<8x128xf32, #tpu.memory_space<vmem>>) attributes {dimension_semantics = [], scalar_prefetch = 0 : i64, scratch_operands = 0 : i64, tpu.core_type = #tpu.core_type<tc>} {
    %c0 = arith.constant 0 : index
    %c0_0 = arith.constant 0 : index
    %0 = vector.load %arg0[%c0, %c0_0] : memref<64x16xf32, #tpu.memory_space<vmem>>, vector<64x16xf32>
    %c0_1 = arith.constant 0 : index
    %c0_2 = arith.constant 0 : index
    %1 = vector.load %arg1[%c0_1, %c0_2] : memref<16x32xf32, #tpu.memory_space<vmem>>, vector<16x32xf32>
    %cst = arith.constant dense<0.000000e+00> : vector<64x32xf32>
    %2 = tpu.matmul %0, %1, %cst {dimension_numbers = #tpu.dot_dimension_numbers<[1], [0], [0], [1], [0, 0, 1, 1], [], []>} : vector<64x16xf32>, vector<16x32xf32>, vector<64x32xf32> -> vector<64x32xf32>
    %c0_3 = arith.constant 0 : index
    %c0_4 = arith.constant 0 : index
    %3 = vector.load %arg7[%c0_3, %c0_4] : memref<1x32xf32, #tpu.memory_space<vmem>>, vector<1x32xf32>
    %4 = vector.broadcast %3 : vector<1x32xf32> to vector<64x32xf32>
    %5 = arith.addf %2, %4 : vector<64x32xf32>
    %c0_5 = arith.constant 0 : index
    %c0_6 = arith.constant 0 : index
    %6 = vector.load %arg2[%c0_5, %c0_6] : memref<16x32xf32, #tpu.memory_space<vmem>>, vector<16x32xf32>
    %cst_7 = arith.constant dense<0.000000e+00> : vector<64x32xf32>
    %7 = tpu.matmul %0, %6, %cst_7 {dimension_numbers = #tpu.dot_dimension_numbers<[1], [0], [0], [1], [0, 0, 1, 1], [], []>} : vector<64x16xf32>, vector<16x32xf32>, vector<64x32xf32> -> vector<64x32xf32>
    %c0_8 = arith.constant 0 : index
    %c0_9 = arith.constant 0 : index
    %8 = vector.load %arg8[%c0_8, %c0_9] : memref<1x32xf32, #tpu.memory_space<vmem>>, vector<1x32xf32>
    %9 = vector.broadcast %8 : vector<1x32xf32> to vector<64x32xf32>
    %10 = arith.addf %7, %9 : vector<64x32xf32>
    %c0_10 = arith.constant 0 : index
    %c0_11 = arith.constant 0 : index
    %11 = vector.load %arg3[%c0_10, %c0_11] : memref<16x32xf32, #tpu.memory_space<vmem>>, vector<16x32xf32>
    %cst_12 = arith.constant dense<0.000000e+00> : vector<64x32xf32>
    %12 = tpu.matmul %0, %11, %cst_12 {dimension_numbers = #tpu.dot_dimension_numbers<[1], [0], [0], [1], [0, 0, 1, 1], [], []>} : vector<64x16xf32>, vector<16x32xf32>, vector<64x32xf32> -> vector<64x32xf32>
    %c0_13 = arith.constant 0 : index
    %c0_14 = arith.constant 0 : index
    %13 = vector.load %arg9[%c0_13, %c0_14] : memref<1x32xf32, #tpu.memory_space<vmem>>, vector<1x32xf32>
    %14 = vector.broadcast %13 : vector<1x32xf32> to vector<64x32xf32>
    %15 = arith.addf %12, %14 : vector<64x32xf32>
    %c0_15 = arith.constant 0 : index
    %c0_16 = arith.constant 0 : index
    %16 = vector.load %arg4[%c0_15, %c0_16] : memref<32x32xf32, #tpu.memory_space<vmem>>, vector<32x32xf32>
    %c0_17 = arith.constant 0 : index
    %c0_18 = arith.constant 0 : index
    %17 = vector.load %arg5[%c0_17, %c0_18] : memref<32x32xf32, #tpu.memory_space<vmem>>, vector<32x32xf32>
    %c0_19 = arith.constant 0 : index
    %c0_20 = arith.constant 0 : index
    %18 = vector.load %arg6[%c0_19, %c0_20] : memref<32x32xf32, #tpu.memory_space<vmem>>, vector<32x32xf32>
    %c0_21 = arith.constant 0 : index
    %c0_22 = arith.constant 0 : index
    %19 = vector.load %arg10[%c0_21, %c0_22] : memref<1x32xf32, #tpu.memory_space<vmem>>, vector<1x32xf32>
    %cst_23 = arith.constant 0.000000e+00 : f32
    %20 = vector.broadcast %cst_23 : f32 to vector<8x32xf32>
    %cst_24 = arith.constant dense<0.000000e+00> : vector<8x32xf32>
    %21 = tpu.matmul %20, %16, %cst_24 {dimension_numbers = #tpu.dot_dimension_numbers<[1], [0], [0], [1], [0, 0, 1, 1], [], []>} : vector<8x32xf32>, vector<32x32xf32>, vector<8x32xf32> -> vector<8x32xf32>
    %cst_25 = arith.constant dense<0.000000e+00> : vector<8x32xf32>
    %22 = tpu.matmul %20, %17, %cst_25 {dimension_numbers = #tpu.dot_dimension_numbers<[1], [0], [0], [1], [0, 0, 1, 1], [], []>} : vector<8x32xf32>, vector<32x32xf32>, vector<8x32xf32> -> vector<8x32xf32>
    %cst_26 = arith.constant dense<0.000000e+00> : vector<8x32xf32>
    %23 = tpu.matmul %20, %18, %cst_26 {dimension_numbers = #tpu.dot_dimension_numbers<[1], [0], [0], [1], [0, 0, 1, 1], [], []>} : vector<8x32xf32>, vector<32x32xf32>, vector<8x32xf32> -> vector<8x32xf32>
    %24 = vector.extract_strided_slice %5 {offsets = [0, 0], sizes = [8, 32], strides = [1, 1]} : vector<64x32xf32> to vector<8x32xf32>
    %25 = arith.addf %24, %21 : vector<8x32xf32>
    %26 = arith.negf %25 : vector<8x32xf32>
    %27 = math.exp %26 : vector<8x32xf32>
    %cst_27 = arith.constant 1.000000e+00 : f32
    %28 = vector.broadcast %cst_27 : f32 to vector<8x32xf32>
    %29 = arith.addf %28, %27 : vector<8x32xf32>
    %30 = arith.divf %28, %29 : vector<8x32xf32>
    %31 = vector.extract_strided_slice %10 {offsets = [0, 0], sizes = [8, 32], strides = [1, 1]} : vector<64x32xf32> to vector<8x32xf32>
    %32 = arith.addf %31, %22 : vector<8x32xf32>
    %33 = arith.negf %32 : vector<8x32xf32>
    %34 = math.exp %33 : vector<8x32xf32>
    %cst_28 = arith.constant 1.000000e+00 : f32
    %35 = vector.broadcast %cst_28 : f32 to vector<8x32xf32>
    %36 = arith.addf %35, %34 : vector<8x32xf32>
    %37 = arith.divf %35, %36 : vector<8x32xf32>
    %38 = vector.extract_strided_slice %15 {offsets = [0, 0], sizes = [8, 32], strides = [1, 1]} : vector<64x32xf32> to vector<8x32xf32>
    %39 = vector.broadcast %19 : vector<1x32xf32> to vector<8x32xf32>
    %40 = arith.addf %23, %39 : vector<8x32xf32>
    %41 = arith.mulf %30, %40 : vector<8x32xf32>
    %42 = arith.addf %38, %41 : vector<8x32xf32>
    %43 = math.tanh %42 : vector<8x32xf32>
    %cst_29 = arith.constant 1.000000e+00 : f32
    %44 = vector.broadcast %cst_29 : f32 to vector<8x32xf32>
    %45 = arith.subf %44, %37 : vector<8x32xf32>
    %46 = arith.mulf %45, %43 : vector<8x32xf32>
    %47 = arith.mulf %37, %20 : vector<8x32xf32>
    %48 = arith.addf %46, %47 : vector<8x32xf32>
    %cst_30 = arith.constant dense<0.000000e+00> : vector<8x32xf32>
    %49 = tpu.matmul %48, %16, %cst_30 {dimension_numbers = #tpu.dot_dimension_numbers<[1], [0], [0], [1], [0, 0, 1, 1], [], []>} : vector<8x32xf32>, vector<32x32xf32>, vector<8x32xf32> -> vector<8x32xf32>
    %cst_31 = arith.constant dense<0.000000e+00> : vector<8x32xf32>
    %50 = tpu.matmul %48, %17, %cst_31 {dimension_numbers = #tpu.dot_dimension_numbers<[1], [0], [0], [1], [0, 0, 1, 1], [], []>} : vector<8x32xf32>, vector<32x32xf32>, vector<8x32xf32> -> vector<8x32xf32>
    %cst_32 = arith.constant dense<0.000000e+00> : vector<8x32xf32>
    %51 = tpu.matmul %48, %18, %cst_32 {dimension_numbers = #tpu.dot_dimension_numbers<[1], [0], [0], [1], [0, 0, 1, 1], [], []>} : vector<8x32xf32>, vector<32x32xf32>, vector<8x32xf32> -> vector<8x32xf32>
    %52 = vector.extract_strided_slice %5 {offsets = [8, 0], sizes = [8, 32], strides = [1, 1]} : vector<64x32xf32> to vector<8x32xf32>
    %53 = arith.addf %52, %49 : vector<8x32xf32>
    %54 = arith.negf %53 : vector<8x32xf32>
    %55 = math.exp %54 : vector<8x32xf32>
    %cst_33 = arith.constant 1.000000e+00 : f32
    %56 = vector.broadcast %cst_33 : f32 to vector<8x32xf32>
    %57 = arith.addf %56, %55 : vector<8x32xf32>
    %58 = arith.divf %56, %57 : vector<8x32xf32>
    %59 = vector.extract_strided_slice %10 {offsets = [8, 0], sizes = [8, 32], strides = [1, 1]} : vector<64x32xf32> to vector<8x32xf32>
    %60 = arith.addf %59, %50 : vector<8x32xf32>
    %61 = arith.negf %60 : vector<8x32xf32>
    %62 = math.exp %61 : vector<8x32xf32>
    %cst_34 = arith.constant 1.000000e+00 : f32
    %63 = vector.broadcast %cst_34 : f32 to vector<8x32xf32>
    %64 = arith.addf %63, %62 : vector<8x32xf32>
    %65 = arith.divf %63, %64 : vector<8x32xf32>
    %66 = vector.extract_strided_slice %15 {offsets = [8, 0], sizes = [8, 32], strides = [1, 1]} : vector<64x32xf32> to vector<8x32xf32>
    %67 = vector.broadcast %19 : vector<1x32xf32> to vector<8x32xf32>
    %68 = arith.addf %51, %67 : vector<8x32xf32>
    %69 = arith.mulf %58, %68 : vector<8x32xf32>
    %70 = arith.addf %66, %69 : vector<8x32xf32>
    %71 = math.tanh %70 : vector<8x32xf32>
    %cst_35 = arith.constant 1.000000e+00 : f32
    %72 = vector.broadcast %cst_35 : f32 to vector<8x32xf32>
    %73 = arith.subf %72, %65 : vector<8x32xf32>
    %74 = arith.mulf %73, %71 : vector<8x32xf32>
    %75 = arith.mulf %65, %48 : vector<8x32xf32>
    %76 = arith.addf %74, %75 : vector<8x32xf32>
    %cst_36 = arith.constant dense<0.000000e+00> : vector<8x32xf32>
    %77 = tpu.matmul %76, %16, %cst_36 {dimension_numbers = #tpu.dot_dimension_numbers<[1], [0], [0], [1], [0, 0, 1, 1], [], []>} : vector<8x32xf32>, vector<32x32xf32>, vector<8x32xf32> -> vector<8x32xf32>
    %cst_37 = arith.constant dense<0.000000e+00> : vector<8x32xf32>
    %78 = tpu.matmul %76, %17, %cst_37 {dimension_numbers = #tpu.dot_dimension_numbers<[1], [0], [0], [1], [0, 0, 1, 1], [], []>} : vector<8x32xf32>, vector<32x32xf32>, vector<8x32xf32> -> vector<8x32xf32>
    %cst_38 = arith.constant dense<0.000000e+00> : vector<8x32xf32>
    %79 = tpu.matmul %76, %18, %cst_38 {dimension_numbers = #tpu.dot_dimension_numbers<[1], [0], [0], [1], [0, 0, 1, 1], [], []>} : vector<8x32xf32>, vector<32x32xf32>, vector<8x32xf32> -> vector<8x32xf32>
    %80 = vector.extract_strided_slice %5 {offsets = [16, 0], sizes = [8, 32], strides = [1, 1]} : vector<64x32xf32> to vector<8x32xf32>
    %81 = arith.addf %80, %77 : vector<8x32xf32>
    %82 = arith.negf %81 : vector<8x32xf32>
    %83 = math.exp %82 : vector<8x32xf32>
    %cst_39 = arith.constant 1.000000e+00 : f32
    %84 = vector.broadcast %cst_39 : f32 to vector<8x32xf32>
    %85 = arith.addf %84, %83 : vector<8x32xf32>
    %86 = arith.divf %84, %85 : vector<8x32xf32>
    %87 = vector.extract_strided_slice %10 {offsets = [16, 0], sizes = [8, 32], strides = [1, 1]} : vector<64x32xf32> to vector<8x32xf32>
    %88 = arith.addf %87, %78 : vector<8x32xf32>
    %89 = arith.negf %88 : vector<8x32xf32>
    %90 = math.exp %89 : vector<8x32xf32>
    %cst_40 = arith.constant 1.000000e+00 : f32
    %91 = vector.broadcast %cst_40 : f32 to vector<8x32xf32>
    %92 = arith.addf %91, %90 : vector<8x32xf32>
    %93 = arith.divf %91, %92 : vector<8x32xf32>
    %94 = vector.extract_strided_slice %15 {offsets = [16, 0], sizes = [8, 32], strides = [1, 1]} : vector<64x32xf32> to vector<8x32xf32>
    %95 = vector.broadcast %19 : vector<1x32xf32> to vector<8x32xf32>
    %96 = arith.addf %79, %95 : vector<8x32xf32>
    %97 = arith.mulf %86, %96 : vector<8x32xf32>
    %98 = arith.addf %94, %97 : vector<8x32xf32>
    %99 = math.tanh %98 : vector<8x32xf32>
    %cst_41 = arith.constant 1.000000e+00 : f32
    %100 = vector.broadcast %cst_41 : f32 to vector<8x32xf32>
    %101 = arith.subf %100, %93 : vector<8x32xf32>
    %102 = arith.mulf %101, %99 : vector<8x32xf32>
    %103 = arith.mulf %93, %76 : vector<8x32xf32>
    %104 = arith.addf %102, %103 : vector<8x32xf32>
    %cst_42 = arith.constant dense<0.000000e+00> : vector<8x32xf32>
    %105 = tpu.matmul %104, %16, %cst_42 {dimension_numbers = #tpu.dot_dimension_numbers<[1], [0], [0], [1], [0, 0, 1, 1], [], []>} : vector<8x32xf32>, vector<32x32xf32>, vector<8x32xf32> -> vector<8x32xf32>
    %cst_43 = arith.constant dense<0.000000e+00> : vector<8x32xf32>
    %106 = tpu.matmul %104, %17, %cst_43 {dimension_numbers = #tpu.dot_dimension_numbers<[1], [0], [0], [1], [0, 0, 1, 1], [], []>} : vector<8x32xf32>, vector<32x32xf32>, vector<8x32xf32> -> vector<8x32xf32>
    %cst_44 = arith.constant dense<0.000000e+00> : vector<8x32xf32>
    %107 = tpu.matmul %104, %18, %cst_44 {dimension_numbers = #tpu.dot_dimension_numbers<[1], [0], [0], [1], [0, 0, 1, 1], [], []>} : vector<8x32xf32>, vector<32x32xf32>, vector<8x32xf32> -> vector<8x32xf32>
    %108 = vector.extract_strided_slice %5 {offsets = [24, 0], sizes = [8, 32], strides = [1, 1]} : vector<64x32xf32> to vector<8x32xf32>
    %109 = arith.addf %108, %105 : vector<8x32xf32>
    %110 = arith.negf %109 : vector<8x32xf32>
    %111 = math.exp %110 : vector<8x32xf32>
    %cst_45 = arith.constant 1.000000e+00 : f32
    %112 = vector.broadcast %cst_45 : f32 to vector<8x32xf32>
    %113 = arith.addf %112, %111 : vector<8x32xf32>
    %114 = arith.divf %112, %113 : vector<8x32xf32>
    %115 = vector.extract_strided_slice %10 {offsets = [24, 0], sizes = [8, 32], strides = [1, 1]} : vector<64x32xf32> to vector<8x32xf32>
    %116 = arith.addf %115, %106 : vector<8x32xf32>
    %117 = arith.negf %116 : vector<8x32xf32>
    %118 = math.exp %117 : vector<8x32xf32>
    %cst_46 = arith.constant 1.000000e+00 : f32
    %119 = vector.broadcast %cst_46 : f32 to vector<8x32xf32>
    %120 = arith.addf %119, %118 : vector<8x32xf32>
    %121 = arith.divf %119, %120 : vector<8x32xf32>
    %122 = vector.extract_strided_slice %15 {offsets = [24, 0], sizes = [8, 32], strides = [1, 1]} : vector<64x32xf32> to vector<8x32xf32>
    %123 = vector.broadcast %19 : vector<1x32xf32> to vector<8x32xf32>
    %124 = arith.addf %107, %123 : vector<8x32xf32>
    %125 = arith.mulf %114, %124 : vector<8x32xf32>
    %126 = arith.addf %122, %125 : vector<8x32xf32>
    %127 = math.tanh %126 : vector<8x32xf32>
    %cst_47 = arith.constant 1.000000e+00 : f32
    %128 = vector.broadcast %cst_47 : f32 to vector<8x32xf32>
    %129 = arith.subf %128, %121 : vector<8x32xf32>
    %130 = arith.mulf %129, %127 : vector<8x32xf32>
    %131 = arith.mulf %121, %104 : vector<8x32xf32>
    %132 = arith.addf %130, %131 : vector<8x32xf32>
    %cst_48 = arith.constant dense<0.000000e+00> : vector<8x32xf32>
    %133 = tpu.matmul %132, %16, %cst_48 {dimension_numbers = #tpu.dot_dimension_numbers<[1], [0], [0], [1], [0, 0, 1, 1], [], []>} : vector<8x32xf32>, vector<32x32xf32>, vector<8x32xf32> -> vector<8x32xf32>
    %cst_49 = arith.constant dense<0.000000e+00> : vector<8x32xf32>
    %134 = tpu.matmul %132, %17, %cst_49 {dimension_numbers = #tpu.dot_dimension_numbers<[1], [0], [0], [1], [0, 0, 1, 1], [], []>} : vector<8x32xf32>, vector<32x32xf32>, vector<8x32xf32> -> vector<8x32xf32>
    %cst_50 = arith.constant dense<0.000000e+00> : vector<8x32xf32>
    %135 = tpu.matmul %132, %18, %cst_50 {dimension_numbers = #tpu.dot_dimension_numbers<[1], [0], [0], [1], [0, 0, 1, 1], [], []>} : vector<8x32xf32>, vector<32x32xf32>, vector<8x32xf32> -> vector<8x32xf32>
    %136 = vector.extract_strided_slice %5 {offsets = [32, 0], sizes = [8, 32], strides = [1, 1]} : vector<64x32xf32> to vector<8x32xf32>
    %137 = arith.addf %136, %133 : vector<8x32xf32>
    %138 = arith.negf %137 : vector<8x32xf32>
    %139 = math.exp %138 : vector<8x32xf32>
    %cst_51 = arith.constant 1.000000e+00 : f32
    %140 = vector.broadcast %cst_51 : f32 to vector<8x32xf32>
    %141 = arith.addf %140, %139 : vector<8x32xf32>
    %142 = arith.divf %140, %141 : vector<8x32xf32>
    %143 = vector.extract_strided_slice %10 {offsets = [32, 0], sizes = [8, 32], strides = [1, 1]} : vector<64x32xf32> to vector<8x32xf32>
    %144 = arith.addf %143, %134 : vector<8x32xf32>
    %145 = arith.negf %144 : vector<8x32xf32>
    %146 = math.exp %145 : vector<8x32xf32>
    %cst_52 = arith.constant 1.000000e+00 : f32
    %147 = vector.broadcast %cst_52 : f32 to vector<8x32xf32>
    %148 = arith.addf %147, %146 : vector<8x32xf32>
    %149 = arith.divf %147, %148 : vector<8x32xf32>
    %150 = vector.extract_strided_slice %15 {offsets = [32, 0], sizes = [8, 32], strides = [1, 1]} : vector<64x32xf32> to vector<8x32xf32>
    %151 = vector.broadcast %19 : vector<1x32xf32> to vector<8x32xf32>
    %152 = arith.addf %135, %151 : vector<8x32xf32>
    %153 = arith.mulf %142, %152 : vector<8x32xf32>
    %154 = arith.addf %150, %153 : vector<8x32xf32>
    %155 = math.tanh %154 : vector<8x32xf32>
    %cst_53 = arith.constant 1.000000e+00 : f32
    %156 = vector.broadcast %cst_53 : f32 to vector<8x32xf32>
    %157 = arith.subf %156, %149 : vector<8x32xf32>
    %158 = arith.mulf %157, %155 : vector<8x32xf32>
    %159 = arith.mulf %149, %132 : vector<8x32xf32>
    %160 = arith.addf %158, %159 : vector<8x32xf32>
    %cst_54 = arith.constant dense<0.000000e+00> : vector<8x32xf32>
    %161 = tpu.matmul %160, %16, %cst_54 {dimension_numbers = #tpu.dot_dimension_numbers<[1], [0], [0], [1], [0, 0, 1, 1], [], []>} : vector<8x32xf32>, vector<32x32xf32>, vector<8x32xf32> -> vector<8x32xf32>
    %cst_55 = arith.constant dense<0.000000e+00> : vector<8x32xf32>
    %162 = tpu.matmul %160, %17, %cst_55 {dimension_numbers = #tpu.dot_dimension_numbers<[1], [0], [0], [1], [0, 0, 1, 1], [], []>} : vector<8x32xf32>, vector<32x32xf32>, vector<8x32xf32> -> vector<8x32xf32>
    %cst_56 = arith.constant dense<0.000000e+00> : vector<8x32xf32>
    %163 = tpu.matmul %160, %18, %cst_56 {dimension_numbers = #tpu.dot_dimension_numbers<[1], [0], [0], [1], [0, 0, 1, 1], [], []>} : vector<8x32xf32>, vector<32x32xf32>, vector<8x32xf32> -> vector<8x32xf32>
    %164 = vector.extract_strided_slice %5 {offsets = [40, 0], sizes = [8, 32], strides = [1, 1]} : vector<64x32xf32> to vector<8x32xf32>
    %165 = arith.addf %164, %161 : vector<8x32xf32>
    %166 = arith.negf %165 : vector<8x32xf32>
    %167 = math.exp %166 : vector<8x32xf32>
    %cst_57 = arith.constant 1.000000e+00 : f32
    %168 = vector.broadcast %cst_57 : f32 to vector<8x32xf32>
    %169 = arith.addf %168, %167 : vector<8x32xf32>
    %170 = arith.divf %168, %169 : vector<8x32xf32>
    %171 = vector.extract_strided_slice %10 {offsets = [40, 0], sizes = [8, 32], strides = [1, 1]} : vector<64x32xf32> to vector<8x32xf32>
    %172 = arith.addf %171, %162 : vector<8x32xf32>
    %173 = arith.negf %172 : vector<8x32xf32>
    %174 = math.exp %173 : vector<8x32xf32>
    %cst_58 = arith.constant 1.000000e+00 : f32
    %175 = vector.broadcast %cst_58 : f32 to vector<8x32xf32>
    %176 = arith.addf %175, %174 : vector<8x32xf32>
    %177 = arith.divf %175, %176 : vector<8x32xf32>
    %178 = vector.extract_strided_slice %15 {offsets = [40, 0], sizes = [8, 32], strides = [1, 1]} : vector<64x32xf32> to vector<8x32xf32>
    %179 = vector.broadcast %19 : vector<1x32xf32> to vector<8x32xf32>
    %180 = arith.addf %163, %179 : vector<8x32xf32>
    %181 = arith.mulf %170, %180 : vector<8x32xf32>
    %182 = arith.addf %178, %181 : vector<8x32xf32>
    %183 = math.tanh %182 : vector<8x32xf32>
    %cst_59 = arith.constant 1.000000e+00 : f32
    %184 = vector.broadcast %cst_59 : f32 to vector<8x32xf32>
    %185 = arith.subf %184, %177 : vector<8x32xf32>
    %186 = arith.mulf %185, %183 : vector<8x32xf32>
    %187 = arith.mulf %177, %160 : vector<8x32xf32>
    %188 = arith.addf %186, %187 : vector<8x32xf32>
    %cst_60 = arith.constant dense<0.000000e+00> : vector<8x32xf32>
    %189 = tpu.matmul %188, %16, %cst_60 {dimension_numbers = #tpu.dot_dimension_numbers<[1], [0], [0], [1], [0, 0, 1, 1], [], []>} : vector<8x32xf32>, vector<32x32xf32>, vector<8x32xf32> -> vector<8x32xf32>
    %cst_61 = arith.constant dense<0.000000e+00> : vector<8x32xf32>
    %190 = tpu.matmul %188, %17, %cst_61 {dimension_numbers = #tpu.dot_dimension_numbers<[1], [0], [0], [1], [0, 0, 1, 1], [], []>} : vector<8x32xf32>, vector<32x32xf32>, vector<8x32xf32> -> vector<8x32xf32>
    %cst_62 = arith.constant dense<0.000000e+00> : vector<8x32xf32>
    %191 = tpu.matmul %188, %18, %cst_62 {dimension_numbers = #tpu.dot_dimension_numbers<[1], [0], [0], [1], [0, 0, 1, 1], [], []>} : vector<8x32xf32>, vector<32x32xf32>, vector<8x32xf32> -> vector<8x32xf32>
    %192 = vector.extract_strided_slice %5 {offsets = [48, 0], sizes = [8, 32], strides = [1, 1]} : vector<64x32xf32> to vector<8x32xf32>
    %193 = arith.addf %192, %189 : vector<8x32xf32>
    %194 = arith.negf %193 : vector<8x32xf32>
    %195 = math.exp %194 : vector<8x32xf32>
    %cst_63 = arith.constant 1.000000e+00 : f32
    %196 = vector.broadcast %cst_63 : f32 to vector<8x32xf32>
    %197 = arith.addf %196, %195 : vector<8x32xf32>
    %198 = arith.divf %196, %197 : vector<8x32xf32>
    %199 = vector.extract_strided_slice %10 {offsets = [48, 0], sizes = [8, 32], strides = [1, 1]} : vector<64x32xf32> to vector<8x32xf32>
    %200 = arith.addf %199, %190 : vector<8x32xf32>
    %201 = arith.negf %200 : vector<8x32xf32>
    %202 = math.exp %201 : vector<8x32xf32>
    %cst_64 = arith.constant 1.000000e+00 : f32
    %203 = vector.broadcast %cst_64 : f32 to vector<8x32xf32>
    %204 = arith.addf %203, %202 : vector<8x32xf32>
    %205 = arith.divf %203, %204 : vector<8x32xf32>
    %206 = vector.extract_strided_slice %15 {offsets = [48, 0], sizes = [8, 32], strides = [1, 1]} : vector<64x32xf32> to vector<8x32xf32>
    %207 = vector.broadcast %19 : vector<1x32xf32> to vector<8x32xf32>
    %208 = arith.addf %191, %207 : vector<8x32xf32>
    %209 = arith.mulf %198, %208 : vector<8x32xf32>
    %210 = arith.addf %206, %209 : vector<8x32xf32>
    %211 = math.tanh %210 : vector<8x32xf32>
    %cst_65 = arith.constant 1.000000e+00 : f32
    %212 = vector.broadcast %cst_65 : f32 to vector<8x32xf32>
    %213 = arith.subf %212, %205 : vector<8x32xf32>
    %214 = arith.mulf %213, %211 : vector<8x32xf32>
    %215 = arith.mulf %205, %188 : vector<8x32xf32>
    %216 = arith.addf %214, %215 : vector<8x32xf32>
    %cst_66 = arith.constant dense<0.000000e+00> : vector<8x32xf32>
    %217 = tpu.matmul %216, %16, %cst_66 {dimension_numbers = #tpu.dot_dimension_numbers<[1], [0], [0], [1], [0, 0, 1, 1], [], []>} : vector<8x32xf32>, vector<32x32xf32>, vector<8x32xf32> -> vector<8x32xf32>
    %cst_67 = arith.constant dense<0.000000e+00> : vector<8x32xf32>
    %218 = tpu.matmul %216, %17, %cst_67 {dimension_numbers = #tpu.dot_dimension_numbers<[1], [0], [0], [1], [0, 0, 1, 1], [], []>} : vector<8x32xf32>, vector<32x32xf32>, vector<8x32xf32> -> vector<8x32xf32>
    %cst_68 = arith.constant dense<0.000000e+00> : vector<8x32xf32>
    %219 = tpu.matmul %216, %18, %cst_68 {dimension_numbers = #tpu.dot_dimension_numbers<[1], [0], [0], [1], [0, 0, 1, 1], [], []>} : vector<8x32xf32>, vector<32x32xf32>, vector<8x32xf32> -> vector<8x32xf32>
    %220 = vector.extract_strided_slice %5 {offsets = [56, 0], sizes = [8, 32], strides = [1, 1]} : vector<64x32xf32> to vector<8x32xf32>
    %221 = arith.addf %220, %217 : vector<8x32xf32>
    %222 = arith.negf %221 : vector<8x32xf32>
    %223 = math.exp %222 : vector<8x32xf32>
    %cst_69 = arith.constant 1.000000e+00 : f32
    %224 = vector.broadcast %cst_69 : f32 to vector<8x32xf32>
    %225 = arith.addf %224, %223 : vector<8x32xf32>
    %226 = arith.divf %224, %225 : vector<8x32xf32>
    %227 = vector.extract_strided_slice %10 {offsets = [56, 0], sizes = [8, 32], strides = [1, 1]} : vector<64x32xf32> to vector<8x32xf32>
    %228 = arith.addf %227, %218 : vector<8x32xf32>
    %229 = arith.negf %228 : vector<8x32xf32>
    %230 = math.exp %229 : vector<8x32xf32>
    %cst_70 = arith.constant 1.000000e+00 : f32
    %231 = vector.broadcast %cst_70 : f32 to vector<8x32xf32>
    %232 = arith.addf %231, %230 : vector<8x32xf32>
    %233 = arith.divf %231, %232 : vector<8x32xf32>
    %234 = vector.extract_strided_slice %15 {offsets = [56, 0], sizes = [8, 32], strides = [1, 1]} : vector<64x32xf32> to vector<8x32xf32>
    %235 = vector.broadcast %19 : vector<1x32xf32> to vector<8x32xf32>
    %236 = arith.addf %219, %235 : vector<8x32xf32>
    %237 = arith.mulf %226, %236 : vector<8x32xf32>
    %238 = arith.addf %234, %237 : vector<8x32xf32>
    %239 = math.tanh %238 : vector<8x32xf32>
    %cst_71 = arith.constant 1.000000e+00 : f32
    %240 = vector.broadcast %cst_71 : f32 to vector<8x32xf32>
    %241 = arith.subf %240, %233 : vector<8x32xf32>
    %242 = arith.mulf %241, %239 : vector<8x32xf32>
    %243 = arith.mulf %233, %216 : vector<8x32xf32>
    %244 = arith.addf %242, %243 : vector<8x32xf32>
    %c0_72 = arith.constant 0 : index
    %c0_73 = arith.constant 0 : index
    %245 = vector.load %arg11[%c0_72, %c0_73] : memref<32x128xf32, #tpu.memory_space<vmem>>, vector<32x128xf32>
    %cst_74 = arith.constant dense<0.000000e+00> : vector<8x128xf32>
    %246 = tpu.matmul %244, %245, %cst_74 {dimension_numbers = #tpu.dot_dimension_numbers<[1], [0], [0], [1], [0, 0, 1, 1], [], []>} : vector<8x32xf32>, vector<32x128xf32>, vector<8x128xf32> -> vector<8x128xf32>
    %c0_75 = arith.constant 0 : index
    %c0_76 = arith.constant 0 : index
    %247 = vector.load %arg12[%c0_75, %c0_76] : memref<1x128xf32, #tpu.memory_space<vmem>>, vector<1x128xf32>
    %248 = vector.broadcast %247 : vector<1x128xf32> to vector<8x128xf32>
    %249 = arith.addf %246, %248 : vector<8x128xf32>
    %c0_77 = arith.constant 0 : index
    %c0_78 = arith.constant 0 : index
    %250 = vector.load %arg13[%c0_77, %c0_78] : memref<128x128xf32, #tpu.memory_space<vmem>>, vector<128x128xf32>
    %cst_79 = arith.constant dense<0.000000e+00> : vector<8x128xf32>
    %251 = tpu.matmul %249, %250, %cst_79 {dimension_numbers = #tpu.dot_dimension_numbers<[1], [0], [0], [1], [0, 0, 1, 1], [], []>} : vector<8x128xf32>, vector<128x128xf32>, vector<8x128xf32> -> vector<8x128xf32>
    %c0_80 = arith.constant 0 : index
    %c0_81 = arith.constant 0 : index
    %252 = vector.load %arg14[%c0_80, %c0_81] : memref<1x128xf32, #tpu.memory_space<vmem>>, vector<1x128xf32>
    %253 = vector.broadcast %252 : vector<1x128xf32> to vector<8x128xf32>
    %254 = arith.addf %251, %253 : vector<8x128xf32>
    %255 = arith.negf %254 : vector<8x128xf32>
    %256 = math.exp %255 : vector<8x128xf32>
    %cst_82 = arith.constant 1.000000e+00 : f32
    %257 = vector.broadcast %cst_82 : f32 to vector<8x128xf32>
    %258 = arith.addf %257, %256 : vector<8x128xf32>
    %259 = arith.divf %257, %258 : vector<8x128xf32>
    %c0_83 = arith.constant 0 : index
    %c0_84 = arith.constant 0 : index
    %260 = vector.load %arg15[%c0_83, %c0_84] : memref<8x128xf32, #tpu.memory_space<vmem>>, vector<8x128xf32>
    tpu.vector_store %arg15[%c0_83, %c0_84], %259 {strides = array<i32>} : memref<8x128xf32, #tpu.memory_space<vmem>>, vector<8x128xf32>,
    return
  }
}

</mosaic_0001>

<llo_original>
// kernel: tpu_custom_call.1
$region0: #{tpu_custom_call.1}
  #allocation0 [shape = 'u32[]', space=smem, size = 0x4, offset = 0x4, fixed_abs, tag = 'smem constant byte address 0x4 - core index']
  #allocation1 [shape = 'u32[72,128]{1,0:T(1,128)}', space=vmem, size = 0x9000, scoped, tag = 'internal scratch']
  %s0 = inlined_call_operand.vmem [shape: f32[64,16], index: 0, kind: input, shape index: {}]
  %s1 = inlined_call_operand.vmem [shape: f32[16,32], index: 1, kind: input, shape index: {}]
  %s2 = inlined_call_operand.hbm [shape: f32[16,32], index: 2, kind: input, shape index: {}]
  %s3 = inlined_call_operand.hbm [shape: f32[16,32], index: 3, kind: input, shape index: {}]
  %s4 = inlined_call_operand.vmem [shape: f32[32,32], index: 4, kind: input, shape index: {}]
  %s5 = inlined_call_operand.vmem [shape: f32[32,32], index: 5, kind: input, shape index: {}]
  %s6 = inlined_call_operand.hbm [shape: f32[32,32], index: 6, kind: input, shape index: {}]
  %s7 = inlined_call_operand.vmem [shape: f32[1,32], index: 7, kind: input, shape index: {}]
  %s8 = inlined_call_operand.vmem [shape: f32[1,32], index: 8, kind: input, shape index: {}]
  %s9 = inlined_call_operand.vmem [shape: f32[1,32], index: 9, kind: input, shape index: {}]
  %s10 = inlined_call_operand.vmem [shape: f32[1,32], index: 10, kind: input, shape index: {}]
  %s11 = inlined_call_operand.hbm [shape: f32[32,128], index: 11, kind: input, shape index: {}]
  %s12 = inlined_call_operand.vmem [shape: f32[1,128], index: 12, kind: input, shape index: {}]
  %s13 = inlined_call_operand.hbm [shape: f32[128,128], index: 13, kind: input, shape index: {}]
  %s14 = inlined_call_operand.vmem [shape: f32[1,128], index: 14, kind: input, shape index: {}]
  %s15 = inlined_call_operand.hbm [shape: f32[8,128], index: 15, kind: output, shape index: {}]
  %s16 = sld [smem:[#allocation0]]
  $region90: #{tpu_custom_call.1} parent=0
    _
  %s18 = ssub.s32 1, %s16
  %s19 = scalar_select 0, %s18, %s16
  $region1: #{tpu_custom_call.1} parent=0
    #allocation2 [shape = 'u8[8192]{0}', space=vmem, size = 0x2000, scoped, tag = 'input window, operand 2, single buffered']
    #allocation3 [shape = 's32[1]{0}', space=sflag, size = 0x4, scoped, tag = 'scoped memory for tpu_custom_call.1']
    #allocation4 [shape = 's32[1]{0}', space=sflag, size = 0x4, scoped, tag = 'scoped memory for tpu_custom_call.1']
    #allocation5 [shape = 'u8[8192]{0}', space=vmem, size = 0x2000, scoped, tag = 'input window, operand 3, single buffered']
    #allocation6 [shape = 's32[1]{0}', space=sflag, size = 0x4, scoped, tag = 'scoped memory for tpu_custom_call.1']
    #allocation7 [shape = 'u8[16384]{0}', space=vmem, size = 0x4000, scoped, tag = 'input window, operand 6, single buffered']
    #allocation8 [shape = 'u8[16384]{0}', space=vmem, size = 0x4000, scoped, tag = 'input window, operand 11, single buffered']
    #allocation9 [shape = 's32[1]{0}', space=sflag, size = 0x4, scoped, tag = 'scoped memory for tpu_custom_call.1']
    #allocation10 [shape = 'u8[65536]{0}', space=vmem, size = 0x10000, scoped, tag = 'input window, operand 13, single buffered']
    #allocation11 [shape = 'u8[4096]{0}', space=vmem, size = 0x1000, scoped, tag = 'output window, operand 0, single buffered']
    %20 = vsyncpa [#allocation3], 0
    %21 = vsyncpa [#allocation6], 0
    %22 = vsyncpa [#allocation9], 0
    %23 = vsyncpa [#allocation4], 0
    // Predicated region
    $region2: #{tpu_custom_call.1} parent=1 // pred_check
      _
    $region3: #{tpu_custom_call.1} parent=1 // pred_check_branch
      %25 = sbr.rel (0) target = $region5
    $region4: #{tpu_custom_call.1} parent=1 // pred_region
      _
    $region5: #{tpu_custom_call.1} parent=1 // pred_fallthru
      _
    // Predicated region
    $region6: #{tpu_custom_call.1} parent=1 // pred_check
      _
    $region7: #{tpu_custom_call.1} parent=1 // pred_check_branch
      %27 = sbr.rel (0) target = $region9
    $region8: #{tpu_custom_call.1} parent=1 // pred_region
      _
    $region9: #{tpu_custom_call.1} parent=1 // pred_fallthru
      _
    // Predicated region
    $region10: #{tpu_custom_call.1} parent=1 // pred_check
      _
    $region11: #{tpu_custom_call.1} parent=1 // pred_check_branch
      %29 = sbr.rel (0) target = $region13
    $region12: #{tpu_custom_call.1} parent=1 // pred_region
      %31 = vsyncadd [#allocation3], 0
      %s32 = sshll.u32 %s2, 4
      %s33 = int_to_ptr.hbm [resolvable:$true] %s32
      %s34 = sshll.u32 [#allocation2], 4
      %s35 = int_to_ptr.vmem [resolvable:$true] %s34
      %40 = dma.hbm_to_vmem [thread:$0]  %s33, 256, %s35, [#allocation3], 128, 128, 8
    $region13: #{tpu_custom_call.1} parent=1 // pred_fallthru
      _
    // Predicated region
    $region14: #{tpu_custom_call.1} parent=1 // pred_check
      _
    $region15: #{tpu_custom_call.1} parent=1 // pred_check_branch
      %42 = sbr.rel (0) target = $region17
    $region16: #{tpu_custom_call.1} parent=1 // pred_region
      %44 = vsyncadd [#allocation6], 0
      %s45 = sshll.u32 %s3, 4
      %s46 = int_to_ptr.hbm [resolvable:$true] %s45
      %s47 = sshll.u32 [#allocation5], 4
      %s48 = int_to_ptr.vmem [resolvable:$true] %s47
      %53 = dma.hbm_to_vmem [thread:$0]  %s46, 256, %s48, [#allocation6], 128, 128, 8
    $region17: #{tpu_custom_call.1} parent=1 // pred_fallthru
      _
    // Predicated region
    $region18: #{tpu_custom_call.1} parent=1 // pred_check
      _
    $region19: #{tpu_custom_call.1} parent=1 // pred_check_branch
      %55 = sbr.rel (0) target = $region21
    $region20: #{tpu_custom_call.1} parent=1 // pred_region
      _
    $region21: #{tpu_custom_call.1} parent=1 // pred_fallthru
      _
    // Predicated region
    $region22: #{tpu_custom_call.1} parent=1 // pred_check
      _
    $region23: #{tpu_custom_call.1} parent=1 // pred_check_branch
      %57 = sbr.rel (0) target = $region25
    $region24: #{tpu_custom_call.1} parent=1 // pred_region
      _
    $region25: #{tpu_custom_call.1} parent=1 // pred_fallthru
      _
    // Predicated region
    $region26: #{tpu_custom_call.1} parent=1 // pred_check
      _
    $region27: #{tpu_custom_call.1} parent=1 // pred_check_branch
      %59 = sbr.rel (0) target = $region29
    $region28: #{tpu_custom_call.1} parent=1 // pred_region
      %61 = vsyncadd [#allocation6], 0
      %s62 = sshll.u32 %s6, 4
      %s63 = int_to_ptr.hbm [resolvable:$true] %s62
      %s64 = sshll.u32 [#allocation7], 4
      %s65 = int_to_ptr.vmem [resolvable:$true] %s64
      %70 = dma.hbm_to_vmem [thread:$0]  %s63, 512, %s65, [#allocation6], 128, 128, 8
    $region29: #{tpu_custom_call.1} parent=1 // pred_fallthru
      _
    // Predicated region
    $region30: #{tpu_custom_call.1} parent=1 // pred_check
      _
    $region31: #{tpu_custom_call.1} parent=1 // pred_check_branch
      %72 = sbr.rel (0) target = $region33
    $region32: #{tpu_custom_call.1} parent=1 // pred_region
      _
    $region33: #{tpu_custom_call.1} parent=1 // pred_fallthru
      _
    // Predicated region
    $region34: #{tpu_custom_call.1} parent=1 // pred_check
      _
    $region35: #{tpu_custom_call.1} parent=1 // pred_check_branch
      %74 = sbr.rel (0) target = $region37
    $region36: #{tpu_custom_call.1} parent=1 // pred_region
      _
    $region37: #{tpu_custom_call.1} parent=1 // pred_fallthru
      _
    // Predicated region
    $region38: #{tpu_custom_call.1} parent=1 // pred_check
      _
    $region39: #{tpu_custom_call.1} parent=1 // pred_check_branch
      %76 = sbr.rel (0) target = $region41
    $region40: #{tpu_custom_call.1} parent=1 // pred_region
      _
    $region41: #{tpu_custom_call.1} parent=1 // pred_fallthru
      _
    // Predicated region
    $region42: #{tpu_custom_call.1} parent=1 // pred_check
      _
    $region43: #{tpu_custom_call.1} parent=1 // pred_check_branch
      %78 = sbr.rel (0) target = $region45
    $region44: #{tpu_custom_call.1} parent=1 // pred_region
      _
    $region45: #{tpu_custom_call.1} parent=1 // pred_fallthru
      _
    // Predicated region
    $region46: #{tpu_custom_call.1} parent=1 // pred_check
      _
    $region47: #{tpu_custom_call.1} parent=1 // pred_check_branch
      %80 = sbr.rel (0) target = $region49
    $region48: #{tpu_custom_call.1} parent=1 // pred_region
      %82 = vsyncadd [#allocation9], 0
      %s83 = sshll.u32 %s11, 4
      %s84 = int_to_ptr.hbm [resolvable:$true] %s83
      %s85 = sshll.u32 [#allocation8], 4
      %s86 = int_to_ptr.vmem [resolvable:$true] %s85
      %91 = dma.hbm_to_vmem [thread:$0]  %s84, 512, %s86, [#allocation9], 128, 128, 8
    $region49: #{tpu_custom_call.1} parent=1 // pred_fallthru
      _
    // Predicated region
    $region50: #{tpu_custom_call.1} parent=1 // pred_check
      _
    $region51: #{tpu_custom_call.1} parent=1 // pred_check_branch
      %93 = sbr.rel (0) target = $region53
    $region52: #{tpu_custom_call.1} parent=1 // pred_region
      _
    $region53: #{tpu_custom_call.1} parent=1 // pred_fallthru
      _
    // Predicated region
    $region54: #{tpu_custom_call.1} parent=1 // pred_check
      _
    $region55: #{tpu_custom_call.1} parent=1 // pred_check_branch
      %95 = sbr.rel (0) target = $region57
    $region56: #{tpu_custom_call.1} parent=1 // pred_region
      %97 = vsyncadd [#allocation9], 0
      %s98 = sshll.u32 %s13, 4
      %s99 = int_to_ptr.hbm [resolvable:$true] %s98
      %s100 = sshll.u32 [#allocation10], 4
      %s101 = int_to_ptr.vmem [resolvable:$true] %s100
      %106 = dma.hbm_to_vmem [thread:$0]  %s99, 2048, %s101, [#allocation9], 128, 128, 8
    $region57: #{tpu_custom_call.1} parent=1 // pred_fallthru
      _
    // Predicated region
    $region58: #{tpu_custom_call.1} parent=1 // pred_check
      _
    $region59: #{tpu_custom_call.1} parent=1 // pred_check_branch
      %108 = sbr.rel (0) target = $region61
    $region60: #{tpu_custom_call.1} parent=1 // pred_region
      _
    $region61: #{tpu_custom_call.1} parent=1 // pred_fallthru
      _
    // Predicated region
    $region62: #{tpu_custom_call.1} parent=1 // pred_check
      _
    $region63: #{tpu_custom_call.1} parent=1 // pred_check_branch
      %110 = sbr.rel (0) target = $region65
    $region64: #{tpu_custom_call.1} parent=1 // pred_region
      %112 = dma.done [#allocation3], 256
    $region65: #{tpu_custom_call.1} parent=1 // pred_fallthru
      _
    // Predicated region
    $region66: #{tpu_custom_call.1} parent=1 // pred_check
      _
    $region67: #{tpu_custom_call.1} parent=1 // pred_check_branch
      %114 = sbr.rel (0) target = $region69
    $region68: #{tpu_custom_call.1} parent=1 // pred_region
      %116 = dma.done [#allocation6], 256
    $region69: #{tpu_custom_call.1} parent=1 // pred_fallthru
      _
    // Predicated region
    $region70: #{tpu_custom_call.1} parent=1 // pred_check
      _
    $region71: #{tpu_custom_call.1} parent=1 // pred_check_branch
      %118 = sbr.rel (0) target = $region73
    $region72: #{tpu_custom_call.1} parent=1 // pred_region
      %120 = dma.done [#allocation6], 512
    $region73: #{tpu_custom_call.1} parent=1 // pred_fallthru
      _
    // Predicated region
    $region74: #{tpu_custom_call.1} parent=1 // pred_check
      _
    $region75: #{tpu_custom_call.1} parent=1 // pred_check_branch
      %122 = sbr.rel (0) target = $region77
    $region76: #{tpu_custom_call.1} parent=1 // pred_region
      %124 = dma.done [#allocation9], 512
    $region77: #{tpu_custom_call.1} parent=1 // pred_fallthru
      _
    // Predicated region
    $region78: #{tpu_custom_call.1} parent=1 // pred_check
      _
    $region79: #{tpu_custom_call.1} parent=1 // pred_check_branch
      %126 = sbr.rel (0) target = $region81
    $region80: #{tpu_custom_call.1} parent=1 // pred_region
      %128 = dma.done [#allocation9], 2048
    $region81: #{tpu_custom_call.1} parent=1 // pred_fallthru
      _
    %v129 = vld [vmem:[%s0] sm:$0xff]
    %v130 = vld [vmem:[%s0 + $0x8] sm:$0xff]
    %v131 = vld [vmem:[%s0 + $0x10] sm:$0xff]
    %v132 = vld [vmem:[%s0 + $0x18] sm:$0xff]
    %v133 = vld [vmem:[%s0 + $0x20] sm:$0xff]
    %v134 = vld [vmem:[%s0 + $0x28] sm:$0xff]
    %v135 = vld [vmem:[%s0 + $0x30] sm:$0xff]
    %v136 = vld [vmem:[%s0 + $0x38] sm:$0xff]
    %v137 = vld [vmem:[%s1] sm:$0xff]
    %v138 = vld [vmem:[%s1 + $0x8] sm:$0xff]
    %v139 = vld [vmem:[%s7] sm:$0x1]
    %v141 = vperm.slane %v139, 0
    %vm143 = vcmask 130048
    %v145 = vsel %vm143, %v129, 0
    %v148 = vsel %vm143, %v130, 0
    %v151 = vsel %vm143, %v131, 0
    %v154 = vsel %vm143, %v132, 0
    %v157 = vsel %vm143, %v133, 0
    %v160 = vsel %vm143, %v134, 0
    %v163 = vsel %vm143, %v135, 0
    %v166 = vsel %vm143, %v136, 0
    %168 = vmatpush.msra.mxu0 0.0
    %169 = vmatpush.msra.mxu0 0.0
    %170 = vmatpush.msra.mxu0 0.0
    %171 = vmatpush.msra.mxu0 0.0
    %172 = vmatpush.msra.mxu0 0.0
    %173 = vmatpush.msra.mxu0 0.0
    %174 = vmatpush.msra.mxu0 0.0
    %175 = vmatpush.msra.mxu0 0.0
    %176 = vmatpush.msra.mxu0 0.0
    %177 = vmatpush.msra.mxu0 0.0
    %178 = vmatpush.msra.mxu0 0.0
    %179 = vmatpush.msra.mxu0 0.0
    %180 = vmatpush.msra.mxu0 0.0
    %181 = vmatpush.msra.mxu0 0.0
    %182 = vmatpush.msra.mxu0 %v138
    %183 = vmatpush.msra.mxu0 %v137
    %184 = vmatmul.f32.gmra.mxu0 %v145
    %v185 = vpop.f32.mrf.mxu0
    %v186 = vadd.f32 %v141, %v185
    %187 = vmatmul.f32.gmra.mxu0 %v148
    %v188 = vpop.f32.mrf.mxu0
    %v189 = vadd.f32 %v141, %v188
    %190 = vmatmul.f32.gmra.mxu0 %v151
    %v191 = vpop.f32.mrf.mxu0
    %v192 = vadd.f32 %v141, %v191
    %193 = vmatmul.f32.gmra.mxu0 %v154
    %v194 = vpop.f32.mrf.mxu0
    %v195 = vadd.f32 %v141, %v194
    %196 = vmatmul.f32.gmra.mxu0 %v157
    %v197 = vpop.f32.mrf.mxu0
    %v198 = vadd.f32 %v141, %v197
    %199 = vmatmul.f32.gmra.mxu0 %v160
    %v200 = vpop.f32.mrf.mxu0
    %v201 = vadd.f32 %v141, %v200
    %202 = vmatmul.f32.gmra.mxu0 %v163
    %v203 = vpop.f32.mrf.mxu0
    %v204 = vadd.f32 %v141, %v203
    %205 = vmatmul.f32.gmra.mxu0 %v166
    %v206 = vpop.f32.mrf.mxu0
    %v207 = vadd.f32 %v141, %v206
    %208 = vdwg.mxu0
    %v209 = vld [vmem:[#allocation2] sm:$0xff]
    %v210 = vld [vmem:[#allocation2 + $0x8] sm:$0xff]
    %v211 = vld [vmem:[%s8] sm:$0x1]
    %v213 = vperm.slane %v211, 0
    %215 = vmatpush.msra.mxu0 0.0
    %216 = vmatpush.msra.mxu0 0.0
    %217 = vmatpush.msra.mxu0 0.0
    %218 = vmatpush.msra.mxu0 0.0
    %219 = vmatpush.msra.mxu0 0.0
    %220 = vmatpush.msra.mxu0 0.0
    %221 = vmatpush.msra.mxu0 0.0
    %222 = vmatpush.msra.mxu0 0.0
    %223 = vmatpush.msra.mxu0 0.0
    %224 = vmatpush.msra.mxu0 0.0
    %225 = vmatpush.msra.mxu0 0.0
    %226 = vmatpush.msra.mxu0 0.0
    %227 = vmatpush.msra.mxu0 0.0
    %228 = vmatpush.msra.mxu0 0.0
    %229 = vmatpush.msra.mxu0 %v210
    %230 = vmatpush.msra.mxu0 %v209
    %231 = vmatmul.f32.gmra.mxu0 %v145
    %v232 = vpop.f32.mrf.mxu0
    %v233 = vadd.f32 %v213, %v232
    %234 = vmatmul.f32.gmra.mxu0 %v148
    %v235 = vpop.f32.mrf.mxu0
    %v236 = vadd.f32 %v213, %v235
    %237 = vmatmul.f32.gmra.mxu0 %v151
    %v238 = vpop.f32.mrf.mxu0
    %v239 = vadd.f32 %v213, %v238
    %240 = vmatmul.f32.gmra.mxu0 %v154
    %v241 = vpop.f32.mrf.mxu0
    %v242 = vadd.f32 %v213, %v241
    %243 = vmatmul.f32.gmra.mxu0 %v157
    %v244 = vpop.f32.mrf.mxu0
    %v245 = vadd.f32 %v213, %v244
    %246 = vmatmul.f32.gmra.mxu0 %v160
    %v247 = vpop.f32.mrf.mxu0
    %v248 = vadd.f32 %v213, %v247
    %249 = vmatmul.f32.gmra.mxu0 %v163
    %v250 = vpop.f32.mrf.mxu0
    %v251 = vadd.f32 %v213, %v250
    %252 = vmatmul.f32.gmra.mxu0 %v166
    %v253 = vpop.f32.mrf.mxu0
    %v254 = vadd.f32 %v213, %v253
    %255 = vdwg.mxu0
    %v256 = vld [vmem:[#allocation5] sm:$0xff]
    %v257 = vld [vmem:[#allocation5 + $0x8] sm:$0xff]
    %v258 = vld [vmem:[%s9] sm:$0x1]
    %v260 = vperm.slane %v258, 0
    %262 = vmatpush.msra.mxu0 0.0
    %263 = vmatpush.msra.mxu0 0.0
    %264 = vmatpush.msra.mxu0 0.0
    %265 = vmatpush.msra.mxu0 0.0
    %266 = vmatpush.msra.mxu0 0.0
    %267 = vmatpush.msra.mxu0 0.0
    %268 = vmatpush.msra.mxu0 0.0
    %269 = vmatpush.msra.mxu0 0.0
    %270 = vmatpush.msra.mxu0 0.0
    %271 = vmatpush.msra.mxu0 0.0
    %272 = vmatpush.msra.mxu0 0.0
    %273 = vmatpush.msra.mxu0 0.0
    %274 = vmatpush.msra.mxu0 0.0
    %275 = vmatpush.msra.mxu0 0.0
    %276 = vmatpush.msra.mxu0 %v257
    %277 = vmatpush.msra.mxu0 %v256
    %278 = vmatmul.f32.gmra.mxu0 %v145
    %v279 = vpop.f32.mrf.mxu0
    %v280 = vadd.f32 %v260, %v279
    %281 = vmatmul.f32.gmra.mxu0 %v148
    %v282 = vpop.f32.mrf.mxu0
    %v283 = vadd.f32 %v260, %v282
    %284 = vmatmul.f32.gmra.mxu0 %v151
    %v285 = vpop.f32.mrf.mxu0
    %v286 = vadd.f32 %v260, %v285
    %287 = vmatmul.f32.gmra.mxu0 %v154
    %v288 = vpop.f32.mrf.mxu0
    %v289 = vadd.f32 %v260, %v288
    %290 = vmatmul.f32.gmra.mxu0 %v157
    %v291 = vpop.f32.mrf.mxu0
    %v292 = vadd.f32 %v260, %v291
    %293 = vmatmul.f32.gmra.mxu0 %v160
    %v294 = vpop.f32.mrf.mxu0
    %v295 = vadd.f32 %v260, %v294
    %296 = vmatmul.f32.gmra.mxu0 %v163
    %v297 = vpop.f32.mrf.mxu0
    %v298 = vadd.f32 %v260, %v297
    %299 = vmatmul.f32.gmra.mxu0 %v166
    %v300 = vpop.f32.mrf.mxu0
    %v301 = vadd.f32 %v260, %v300
    %302 = vdwg.mxu0
    %v303 = vld [vmem:[%s4] sm:$0xff]
    %v304 = vld [vmem:[%s4 + $0x8] sm:$0xff]
    %v305 = vld [vmem:[%s4 + $0x10] sm:$0xff]
    %v306 = vld [vmem:[%s4 + $0x18] sm:$0xff]
    %v307 = vld [vmem:[%s5] sm:$0xff]
    %v308 = vld [vmem:[%s5 + $0x8] sm:$0xff]
    %v309 = vld [vmem:[%s5 + $0x10] sm:$0xff]
    %v310 = vld [vmem:[%s5 + $0x18] sm:$0xff]
    %v311 = vld [vmem:[#allocation7] sm:$0xff]
    %v312 = vld [vmem:[#allocation7 + $0x8] sm:$0xff]
    %v313 = vld [vmem:[#allocation7 + $0x10] sm:$0xff]
    %v314 = vld [vmem:[#allocation7 + $0x18] sm:$0xff]
    %v315 = vld [vmem:[%s10] sm:$0x1]
    %vm316 = vcmask 261120
    %v318 = vsel %vm316, 0.0, 0
    %320 = vmatpush.msra.mxu0 0.0
    %321 = vmatpush.msra.mxu0 0.0
    %322 = vmatpush.msra.mxu0 0.0
    %323 = vmatpush.msra.mxu0 0.0
    %324 = vmatpush.msra.mxu0 0.0
    %325 = vmatpush.msra.mxu0 0.0
    %326 = vmatpush.msra.mxu0 0.0
    %327 = vmatpush.msra.mxu0 0.0
    %328 = vmatpush.msra.mxu0 0.0
    %329 = vmatpush.msra.mxu0 0.0
    %330 = vmatpush.msra.mxu0 0.0
    %331 = vmatpush.msra.mxu0 0.0
    %332 = vmatpush.msra.mxu0 %v306
    %333 = vmatpush.msra.mxu0 %v305
    %334 = vmatpush.msra.mxu0 %v304
    %335 = vmatpush.msra.mxu0 %v303
    %336 = vmatmul.f32.gmra.mxu0 %v318
    %v337 = vpop.f32.mrf.mxu0
    %v338 = vadd.f32 0.0, %v337
    %339 = vdwg.mxu0
    %340 = vmatpush.msra.mxu0 0.0
    %341 = vmatpush.msra.mxu0 0.0
    %342 = vmatpush.msra.mxu0 0.0
    %343 = vmatpush.msra.mxu0 0.0
    %344 = vmatpush.msra.mxu0 0.0
    %345 = vmatpush.msra.mxu0 0.0
    %346 = vmatpush.msra.mxu0 0.0
    %347 = vmatpush.msra.mxu0 0.0
    %348 = vmatpush.msra.mxu0 0.0
    %349 = vmatpush.msra.mxu0 0.0
    %350 = vmatpush.msra.mxu0 0.0
    %351 = vmatpush.msra.mxu0 0.0
    %352 = vmatpush.msra.mxu0 %v310
    %353 = vmatpush.msra.mxu0 %v309
    %354 = vmatpush.msra.mxu0 %v308
    %355 = vmatpush.msra.mxu0 %v307
    %356 = vmatmul.f32.gmra.mxu0 %v318
    %v357 = vpop.f32.mrf.mxu0
    %v358 = vadd.f32 0.0, %v357
    %359 = vdwg.mxu0
    %v360 = vadd.f32 %v186, %v338
    %v361 = vxor.u32 %v360, 2147483648
    %v362 = vmul.f32 %v361, 1.442695
    %v363 = vpow.pop %v362
    %v364 = vadd.f32 %v363, 1.0
    %v365 = vrcp.pop %v364
    %v366 = vmul.f32 %v364, %v365
    %v367 = vsub.f32 1.0, %v366
    %v368 = vmul.f32 %v365, %v367
    %v369 = vadd.f32 %v365, %v368
    %vm370 = vweird.f32 %v364
    %vm371 = vweird.f32 %v365
    %vm372 = vmor %vm370, %vm371
    %v373 = vsel %vm372, %v365, %v369
    %v374 = vand.u32 2147483647, %v364
    %vm375 = vcmp.eq.f32.partialorder %v374, 8.507059e+37
    %v376 = vand.u32 %v364, 2147483648
    %v377 = vor.u32 1.1754944e-38, %v376
    %v378 = vsel %vm375, %v377, %v373
    %v379 = vmul.f32 1.0, %v378
    %v380 = vadd.f32 %v233, %v358
    %v381 = vxor.u32 %v380, 2147483648
    %v382 = vmul.f32 %v381, 1.442695
    %v383 = vpow.pop %v382
    %v384 = vadd.f32 %v383, 1.0
    %v385 = vrcp.pop %v384
    %v386 = vmul.f32 %v384, %v385
    %v387 = vsub.f32 1.0, %v386
    %v388 = vmul.f32 %v385, %v387
    %v389 = vadd.f32 %v385, %v388
    %vm390 = vweird.f32 %v384
    %vm391 = vweird.f32 %v385
    %vm392 = vmor %vm390, %vm391
    %v393 = vsel %vm392, %v385, %v389
    %v394 = vand.u32 2147483647, %v384
    %vm395 = vcmp.eq.f32.partialorder %v394, 8.507059e+37
    %v396 = vand.u32 %v384, 2147483648
    %v397 = vor.u32 1.1754944e-38, %v396
    %v398 = vsel %vm395, %v397, %v393
    %v399 = vmul.f32 1.0, %v398
    %v401 = vperm.slane %v315, 0
    %403 = vmatpush.msra.mxu0 0.0
    %404 = vmatpush.msra.mxu0 0.0
    %405 = vmatpush.msra.mxu0 0.0
    %406 = vmatpush.msra.mxu0 0.0
    %407 = vmatpush.msra.mxu0 0.0
    %408 = vmatpush.msra.mxu0 0.0
    %409 = vmatpush.msra.mxu0 0.0
    %410 = vmatpush.msra.mxu0 0.0
    %411 = vmatpush.msra.mxu0 0.0
    %412 = vmatpush.msra.mxu0 0.0
    %413 = vmatpush.msra.mxu0 0.0
    %414 = vmatpush.msra.mxu0 0.0
    %415 = vmatpush.msra.mxu0 %v314
    %416 = vmatpush.msra.mxu0 %v313
    %417 = vmatpush.msra.mxu0 %v312
    %418 = vmatpush.msra.mxu0 %v311
    %419 = vmatmul.f32.gmra.mxu0 %v318
    %v420 = vpop.f32.mrf.mxu0
    %v421 = vadd.f32 %v401, %v420
    %422 = vdwg.mxu0
    %v423 = vmul.f32 %v379, %v421
    %v424 = vadd.f32 %v280, %v423
    %v425 = vtanh.pop %v424
    %v426 = vsub.f32 1.0, %v399
    %v427 = vmul.f32 %v426, %v425
    %v428 = vmul.f32 %v399, 0.0
    %v429 = vadd.f32 %v427, %v428
    %v431 = vsel %vm316, %v429, 0
    %433 = vmatpush.msra.mxu0 0.0
    %434 = vmatpush.msra.mxu0 0.0
    %435 = vmatpush.msra.mxu0 0.0
    %436 = vmatpush.msra.mxu0 0.0
    %437 = vmatpush.msra.mxu0 0.0
    %438 = vmatpush.msra.mxu0 0.0
    %439 = vmatpush.msra.mxu0 0.0
    %440 = vmatpush.msra.mxu0 0.0
    %441 = vmatpush.msra.mxu0 0.0
    %442 = vmatpush.msra.mxu0 0.0
    %443 = vmatpush.msra.mxu0 0.0
    %444 = vmatpush.msra.mxu0 0.0
    %445 = vmatpush.msra.mxu0 %v306
    %446 = vmatpush.msra.mxu0 %v305
    %447 = vmatpush.msra.mxu0 %v304
    %448 = vmatpush.msra.mxu0 %v303
    %449 = vmatmul.f32.gmra.mxu0 %v431
    %v450 = vpop.f32.mrf.mxu0
    %v451 = vadd.f32 0.0, %v450
    %452 = vdwg.mxu0
    %453 = vmatpush.msra.mxu0 0.0
    %454 = vmatpush.msra.mxu0 0.0
    %455 = vmatpush.msra.mxu0 0.0
    %456 = vmatpush.msra.mxu0 0.0
    %457 = vmatpush.msra.mxu0 0.0
    %458 = vmatpush.msra.mxu0 0.0
    %459 = vmatpush.msra.mxu0 0.0
    %460 = vmatpush.msra.mxu0 0.0
    %461 = vmatpush.msra.mxu0 0.0
    %462 = vmatpush.msra.mxu0 0.0
    %463 = vmatpush.msra.mxu0 0.0
    %464 = vmatpush.msra.mxu0 0.0
    %465 = vmatpush.msra.mxu0 %v310
    %466 = vmatpush.msra.mxu0 %v309
    %467 = vmatpush.msra.mxu0 %v308
    %468 = vmatpush.msra.mxu0 %v307
    %469 = vmatmul.f32.gmra.mxu0 %v431
    %v470 = vpop.f32.mrf.mxu0
    %v471 = vadd.f32 0.0, %v470
    %472 = vdwg.mxu0
    %v473 = vadd.f32 %v189, %v451
    %v474 = vxor.u32 %v473, 2147483648
    %v475 = vmul.f32 %v474, 1.442695
    %v476 = vpow.pop %v475
    %v477 = vadd.f32 %v476, 1.0
    %v478 = vrcp.pop %v477
    %v479 = vmul.f32 %v477, %v478
    %v480 = vsub.f32 1.0, %v479
    %v481 = vmul.f32 %v478, %v480
    %v482 = vadd.f32 %v478, %v481
    %vm483 = vweird.f32 %v477
    %vm484 = vweird.f32 %v478
    %vm485 = vmor %vm483, %vm484
    %v486 = vsel %vm485, %v478, %v482
    %v487 = vand.u32 2147483647, %v477
    %vm488 = vcmp.eq.f32.partialorder %v487, 8.507059e+37
    %v489 = vand.u32 %v477, 2147483648
    %v490 = vor.u32 1.1754944e-38, %v489
    %v491 = vsel %vm488, %v490, %v486
    %v492 = vmul.f32 1.0, %v491
    %v493 = vadd.f32 %v236, %v471
    %v494 = vxor.u32 %v493, 2147483648
    %v495 = vmul.f32 %v494, 1.442695
    %v496 = vpow.pop %v495
    %v497 = vadd.f32 %v496, 1.0
    %v498 = vrcp.pop %v497
    %v499 = vmul.f32 %v497, %v498
    %v500 = vsub.f32 1.0, %v499
    %v501 = vmul.f32 %v498, %v500
    %v502 = vadd.f32 %v498, %v501
    %vm503 = vweird.f32 %v497
    %vm504 = vweird.f32 %v498
    %vm505 = vmor %vm503, %vm504
    %v506 = vsel %vm505, %v498, %v502
    %v507 = vand.u32 2147483647, %v497
    %vm508 = vcmp.eq.f32.partialorder %v507, 8.507059e+37
    %v509 = vand.u32 %v497, 2147483648
    %v510 = vor.u32 1.1754944e-38, %v509
    %v511 = vsel %vm508, %v510, %v506
    %v512 = vmul.f32 1.0, %v511
    %513 = vmatpush.msra.mxu0 0.0
    %514 = vmatpush.msra.mxu0 0.0
    %515 = vmatpush.msra.mxu0 0.0
    %516 = vmatpush.msra.mxu0 0.0
    %517 = vmatpush.msra.mxu0 0.0
    %518 = vmatpush.msra.mxu0 0.0
    %519 = vmatpush.msra.mxu0 0.0
    %520 = vmatpush.msra.mxu0 0.0
    %521 = vmatpush.msra.mxu0 0.0
    %522 = vmatpush.msra.mxu0 0.0
    %523 = vmatpush.msra.mxu0 0.0
    %524 = vmatpush.msra.mxu0 0.0
    %525 = vmatpush.msra.mxu0 %v314
    %526 = vmatpush.msra.mxu0 %v313
    %527 = vmatpush.msra.mxu0 %v312
    %528 = vmatpush.msra.mxu0 %v311
    %529 = vmatmul.f32.gmra.mxu0 %v431
    %v530 = vpop.f32.mrf.mxu0
    %v531 = vadd.f32 %v401, %v530
    %532 = vdwg.mxu0
    %v533 = vmul.f32 %v492, %v531
    %v534 = vadd.f32 %v283, %v533
    %v535 = vtanh.pop %v534
    %v536 = vsub.f32 1.0, %v512
    %v537 = vmul.f32 %v536, %v535
    %v538 = vmul.f32 %v512, %v429
    %v539 = vadd.f32 %v537, %v538
    %v541 = vsel %vm316, %v539, 0
    %543 = vmatpush.msra.mxu0 0.0
    %544 = vmatpush.msra.mxu0 0.0
    %545 = vmatpush.msra.mxu0 0.0
    %546 = vmatpush.msra.mxu0 0.0
    %547 = vmatpush.msra.mxu0 0.0
    %548 = vmatpush.msra.mxu0 0.0
    %549 = vmatpush.msra.mxu0 0.0
    %550 = vmatpush.msra.mxu0 0.0
    %551 = vmatpush.msra.mxu0 0.0
    %552 = vmatpush.msra.mxu0 0.0
    %553 = vmatpush.msra.mxu0 0.0
    %554 = vmatpush.msra.mxu0 0.0
    %555 = vmatpush.msra.mxu0 %v306
    %556 = vmatpush.msra.mxu0 %v305
    %557 = vmatpush.msra.mxu0 %v304
    %558 = vmatpush.msra.mxu0 %v303
    %559 = vmatmul.f32.gmra.mxu0 %v541
    %v560 = vpop.f32.mrf.mxu0
    %v561 = vadd.f32 0.0, %v560
    %562 = vdwg.mxu0
    %563 = vmatpush.msra.mxu0 0.0
    %564 = vmatpush.msra.mxu0 0.0
    %565 = vmatpush.msra.mxu0 0.0
    %566 = vmatpush.msra.mxu0 0.0
    %567 = vmatpush.msra.mxu0 0.0
    %568 = vmatpush.msra.mxu0 0.0
    %569 = vmatpush.msra.mxu0 0.0
    %570 = vmatpush.msra.mxu0 0.0
    %571 = vmatpush.msra.mxu0 0.0
    %572 = vmatpush.msra.mxu0 0.0
    %573 = vmatpush.msra.mxu0 0.0
    %574 = vmatpush.msra.mxu0 0.0
    %575 = vmatpush.msra.mxu0 %v310
    %576 = vmatpush.msra.mxu0 %v309
    %577 = vmatpush.msra.mxu0 %v308
    %578 = vmatpush.msra.mxu0 %v307
    %579 = vmatmul.f32.gmra.mxu0 %v541
    %v580 = vpop.f32.mrf.mxu0
    %v581 = vadd.f32 0.0, %v580
    %582 = vdwg.mxu0
    %v583 = vadd.f32 %v192, %v561
    %v584 = vxor.u32 %v583, 2147483648
    %v585 = vmul.f32 %v584, 1.442695
    %v586 = vpow.pop %v585
    %v587 = vadd.f32 %v586, 1.0
    %v588 = vrcp.pop %v587
    %v589 = vmul.f32 %v587, %v588
    %v590 = vsub.f32 1.0, %v589
    %v591 = vmul.f32 %v588, %v590
    %v592 = vadd.f32 %v588, %v591
    %vm593 = vweird.f32 %v587
    %vm594 = vweird.f32 %v588
    %vm595 = vmor %vm593, %vm594
    %v596 = vsel %vm595, %v588, %v592
    %v597 = vand.u32 2147483647, %v587
    %vm598 = vcmp.eq.f32.partialorder %v597, 8.507059e+37
    %v599 = vand.u32 %v587, 2147483648
    %v600 = vor.u32 1.1754944e-38, %v599
    %v601 = vsel %vm598, %v600, %v596
    %v602 = vmul.f32 1.0, %v601
    %v603 = vadd.f32 %v239, %v581
    %v604 = vxor.u32 %v603, 2147483648
    %v605 = vmul.f32 %v604, 1.442695
    %v606 = vpow.pop %v605
    %v607 = vadd.f32 %v606, 1.0
    %v608 = vrcp.pop %v607
    %v609 = vmul.f32 %v607, %v608
    %v610 = vsub.f32 1.0, %v609
    %v611 = vmul.f32 %v608, %v610
    %v612 = vadd.f32 %v608, %v611
    %vm613 = vweird.f32 %v607
    %vm614 = vweird.f32 %v608
    %vm615 = vmor %vm613, %vm614
    %v616 = vsel %vm615, %v608, %v612
    %v617 = vand.u32 2147483647, %v607
    %vm618 = vcmp.eq.f32.partialorder %v617, 8.507059e+37
    %v619 = vand.u32 %v607, 2147483648
    %v620 = vor.u32 1.1754944e-38, %v619
    %v621 = vsel %vm618, %v620, %v616
    %v622 = vmul.f32 1.0, %v621
    %623 = vmatpush.msra.mxu0 0.0
    %624 = vmatpush.msra.mxu0 0.0
    %625 = vmatpush.msra.mxu0 0.0
    %626 = vmatpush.msra.mxu0 0.0
    %627 = vmatpush.msra.mxu0 0.0
    %628 = vmatpush.msra.mxu0 0.0
    %629 = vmatpush.msra.mxu0 0.0
    %630 = vmatpush.msra.mxu0 0.0
    %631 = vmatpush.msra.mxu0 0.0
    %632 = vmatpush.msra.mxu0 0.0
    %633 = vmatpush.msra.mxu0 0.0
    %634 = vmatpush.msra.mxu0 0.0
    %635 = vmatpush.msra.mxu0 %v314
    %636 = vmatpush.msra.mxu0 %v313
    %637 = vmatpush.msra.mxu0 %v312
    %638 = vmatpush.msra.mxu0 %v311
    %639 = vmatmul.f32.gmra.mxu0 %v541
    %v640 = vpop.f32.mrf.mxu0
    %v641 = vadd.f32 %v401, %v640
    %642 = vdwg.mxu0
    %v643 = vmul.f32 %v602, %v641
    %v644 = vadd.f32 %v286, %v643
    %v645 = vtanh.pop %v644
    %v646 = vsub.f32 1.0, %v622
    %v647 = vmul.f32 %v646, %v645
    %v648 = vmul.f32 %v622, %v539
    %v649 = vadd.f32 %v647, %v648
    %v651 = vsel %vm316, %v649, 0
    %653 = vmatpush.msra.mxu0 0.0
    %654 = vmatpush.msra.mxu0 0.0
    %655 = vmatpush.msra.mxu0 0.0
    %656 = vmatpush.msra.mxu0 0.0
    %657 = vmatpush.msra.mxu0 0.0
    %658 = vmatpush.msra.mxu0 0.0
    %659 = vmatpush.msra.mxu0 0.0
    %660 = vmatpush.msra.mxu0 0.0
    %661 = vmatpush.msra.mxu0 0.0
    %662 = vmatpush.msra.mxu0 0.0
    %663 = vmatpush.msra.mxu0 0.0
    %664 = vmatpush.msra.mxu0 0.0
    %665 = vmatpush.msra.mxu0 %v306
    %666 = vmatpush.msra.mxu0 %v305
    %667 = vmatpush.msra.mxu0 %v304
    %668 = vmatpush.msra.mxu0 %v303
    %669 = vmatmul.f32.gmra.mxu0 %v651
    %v670 = vpop.f32.mrf.mxu0
    %v671 = vadd.f32 0.0, %v670
    %672 = vdwg.mxu0
    %673 = vmatpush.msra.mxu0 0.0
    %674 = vmatpush.msra.mxu0 0.0
    %675 = vmatpush.msra.mxu0 0.0
    %676 = vmatpush.msra.mxu0 0.0
    %677 = vmatpush.msra.mxu0 0.0
    %678 = vmatpush.msra.mxu0 0.0
    %679 = vmatpush.msra.mxu0 0.0
    %680 = vmatpush.msra.mxu0 0.0
    %681 = vmatpush.msra.mxu0 0.0
    %682 = vmatpush.msra.mxu0 0.0
    %683 = vmatpush.msra.mxu0 0.0
    %684 = vmatpush.msra.mxu0 0.0
    %685 = vmatpush.msra.mxu0 %v310
    %686 = vmatpush.msra.mxu0 %v309
    %687 = vmatpush.msra.mxu0 %v308
    %688 = vmatpush.msra.mxu0 %v307
    %689 = vmatmul.f32.gmra.mxu0 %v651
    %v690 = vpop.f32.mrf.mxu0
    %v691 = vadd.f32 0.0, %v690
    %692 = vdwg.mxu0
    %v693 = vadd.f32 %v195, %v671
    %v694 = vxor.u32 %v693, 2147483648
    %v695 = vmul.f32 %v694, 1.442695
    %v696 = vpow.pop %v695
    %v697 = vadd.f32 %v696, 1.0
    %v698 = vrcp.pop %v697
    %v699 = vmul.f32 %v697, %v698
    %v700 = vsub.f32 1.0, %v699
    %v701 = vmul.f32 %v698, %v700
    %v702 = vadd.f32 %v698, %v701
    %vm703 = vweird.f32 %v697
    %vm704 = vweird.f32 %v698
    %vm705 = vmor %vm703, %vm704
    %v706 = vsel %vm705, %v698, %v702
    %v707 = vand.u32 2147483647, %v697
    %vm708 = vcmp.eq.f32.partialorder %v707, 8.507059e+37
    %v709 = vand.u32 %v697, 2147483648
    %v710 = vor.u32 1.1754944e-38, %v709
    %v711 = vsel %vm708, %v710, %v706
    %v712 = vmul.f32 1.0, %v711
    %v713 = vadd.f32 %v242, %v691
    %v714 = vxor.u32 %v713, 2147483648
    %v715 = vmul.f32 %v714, 1.442695
    %v716 = vpow.pop %v715
    %v717 = vadd.f32 %v716, 1.0
    %v718 = vrcp.pop %v717
    %v719 = vmul.f32 %v717, %v718
    %v720 = vsub.f32 1.0, %v719
    %v721 = vmul.f32 %v718, %v720
    %v722 = vadd.f32 %v718, %v721
    %vm723 = vweird.f32 %v717
    %vm724 = vweird.f32 %v718
    %vm725 = vmor %vm723, %vm724
    %v726 = vsel %vm725, %v718, %v722
    %v727 = vand.u32 2147483647, %v717
    %vm728 = vcmp.eq.f32.partialorder %v727, 8.507059e+37
    %v729 = vand.u32 %v717, 2147483648
    %v730 = vor.u32 1.1754944e-38, %v729
    %v731 = vsel %vm728, %v730, %v726
    %v732 = vmul.f32 1.0, %v731
    %733 = vmatpush.msra.mxu0 0.0
    %734 = vmatpush.msra.mxu0 0.0
    %735 = vmatpush.msra.mxu0 0.0
    %736 = vmatpush.msra.mxu0 0.0
    %737 = vmatpush.msra.mxu0 0.0
    %738 = vmatpush.msra.mxu0 0.0
    %739 = vmatpush.msra.mxu0 0.0
    %740 = vmatpush.msra.mxu0 0.0
    %741 = vmatpush.msra.mxu0 0.0
    %742 = vmatpush.msra.mxu0 0.0
    %743 = vmatpush.msra.mxu0 0.0
    %744 = vmatpush.msra.mxu0 0.0
    %745 = vmatpush.msra.mxu0 %v314
    %746 = vmatpush.msra.mxu0 %v313
    %747 = vmatpush.msra.mxu0 %v312
    %748 = vmatpush.msra.mxu0 %v311
    %749 = vmatmul.f32.gmra.mxu0 %v651
    %v750 = vpop.f32.mrf.mxu0
    %v751 = vadd.f32 %v401, %v750
    %752 = vdwg.mxu0
    %v753 = vmul.f32 %v712, %v751
    %v754 = vadd.f32 %v289, %v753
    %v755 = vtanh.pop %v754
    %v756 = vsub.f32 1.0, %v732
    %v757 = vmul.f32 %v756, %v755
    %v758 = vmul.f32 %v732, %v649
    %v759 = vadd.f32 %v757, %v758
    %v761 = vsel %vm316, %v759, 0
    %763 = vmatpush.msra.mxu0 0.0
    %764 = vmatpush.msra.mxu0 0.0
    %765 = vmatpush.msra.mxu0 0.0
    %766 = vmatpush.msra.mxu0 0.0
    %767 = vmatpush.msra.mxu0 0.0
    %768 = vmatpush.msra.mxu0 0.0
    %769 = vmatpush.msra.mxu0 0.0
    %770 = vmatpush.msra.mxu0 0.0
    %771 = vmatpush.msra.mxu0 0.0
    %772 = vmatpush.msra.mxu0 0.0
    %773 = vmatpush.msra.mxu0 0.0
    %774 = vmatpush.msra.mxu0 0.0
    %775 = vmatpush.msra.mxu0 %v306
    %776 = vmatpush.msra.mxu0 %v305
    %777 = vmatpush.msra.mxu0 %v304
    %778 = vmatpush.msra.mxu0 %v303
    %779 = vmatmul.f32.gmra.mxu0 %v761
    %v780 = vpop.f32.mrf.mxu0
    %v781 = vadd.f32 0.0, %v780
    %782 = vdwg.mxu0
    %783 = vmatpush.msra.mxu0 0.0
    %784 = vmatpush.msra.mxu0 0.0
    %785 = vmatpush.msra.mxu0 0.0
    %786 = vmatpush.msra.mxu0 0.0
    %787 = vmatpush.msra.mxu0 0.0
    %788 = vmatpush.msra.mxu0 0.0
    %789 = vmatpush.msra.mxu0 0.0
    %790 = vmatpush.msra.mxu0 0.0
    %791 = vmatpush.msra.mxu0 0.0
    %792 = vmatpush.msra.mxu0 0.0
    %793 = vmatpush.msra.mxu0 0.0
    %794 = vmatpush.msra.mxu0 0.0
    %795 = vmatpush.msra.mxu0 %v310
    %796 = vmatpush.msra.mxu0 %v309
    %797 = vmatpush.msra.mxu0 %v308
    %798 = vmatpush.msra.mxu0 %v307
    %799 = vmatmul.f32.gmra.mxu0 %v761
    %v800 = vpop.f32.mrf.mxu0
    %v801 = vadd.f32 0.0, %v800
    %802 = vdwg.mxu0
    %v803 = vadd.f32 %v198, %v781
    %v804 = vxor.u32 %v803, 2147483648
    %v805 = vmul.f32 %v804, 1.442695
    %v806 = vpow.pop %v805
    %v807 = vadd.f32 %v806, 1.0
    %v808 = vrcp.pop %v807
    %v809 = vmul.f32 %v807, %v808
    %v810 = vsub.f32 1.0, %v809
    %v811 = vmul.f32 %v808, %v810
    %v812 = vadd.f32 %v808, %v811
    %vm813 = vweird.f32 %v807
    %vm814 = vweird.f32 %v808
    %vm815 = vmor %vm813, %vm814
    %v816 = vsel %vm815, %v808, %v812
    %v817 = vand.u32 2147483647, %v807
    %vm818 = vcmp.eq.f32.partialorder %v817, 8.507059e+37
    %v819 = vand.u32 %v807, 2147483648
    %v820 = vor.u32 1.1754944e-38, %v819
    %v821 = vsel %vm818, %v820, %v816
    %v822 = vmul.f32 1.0, %v821
    %v823 = vadd.f32 %v245, %v801
    %v824 = vxor.u32 %v823, 2147483648
    %v825 = vmul.f32 %v824, 1.442695
    %v826 = vpow.pop %v825
    %v827 = vadd.f32 %v826, 1.0
    %v828 = vrcp.pop %v827
    %v829 = vmul.f32 %v827, %v828
    %v830 = vsub.f32 1.0, %v829
    %v831 = vmul.f32 %v828, %v830
    %v832 = vadd.f32 %v828, %v831
    %vm833 = vweird.f32 %v827
    %vm834 = vweird.f32 %v828
    %vm835 = vmor %vm833, %vm834
    %v836 = vsel %vm835, %v828, %v832
    %v837 = vand.u32 2147483647, %v827
    %vm838 = vcmp.eq.f32.partialorder %v837, 8.507059e+37
    %v839 = vand.u32 %v827, 2147483648
    %v840 = vor.u32 1.1754944e-38, %v839
    %v841 = vsel %vm838, %v840, %v836
    %v842 = vmul.f32 1.0, %v841
    %843 = vmatpush.msra.mxu0 0.0
    %844 = vmatpush.msra.mxu0 0.0
    %845 = vmatpush.msra.mxu0 0.0
    %846 = vmatpush.msra.mxu0 0.0
    %847 = vmatpush.msra.mxu0 0.0
    %848 = vmatpush.msra.mxu0 0.0
    %849 = vmatpush.msra.mxu0 0.0
    %850 = vmatpush.msra.mxu0 0.0
    %851 = vmatpush.msra.mxu0 0.0
    %852 = vmatpush.msra.mxu0 0.0
    %853 = vmatpush.msra.mxu0 0.0
    %854 = vmatpush.msra.mxu0 0.0
    %855 = vmatpush.msra.mxu0 %v314
    %856 = vmatpush.msra.mxu0 %v313
    %857 = vmatpush.msra.mxu0 %v312
    %858 = vmatpush.msra.mxu0 %v311
    %859 = vmatmul.f32.gmra.mxu0 %v761
    %v860 = vpop.f32.mrf.mxu0
    %v861 = vadd.f32 %v401, %v860
    %862 = vdwg.mxu0
    %v863 = vmul.f32 %v822, %v861
    %v864 = vadd.f32 %v292, %v863
    %v865 = vtanh.pop %v864
    %v866 = vsub.f32 1.0, %v842
    %v867 = vmul.f32 %v866, %v865
    %v868 = vmul.f32 %v842, %v759
    %v869 = vadd.f32 %v867, %v868
    %v871 = vsel %vm316, %v869, 0
    %873 = vmatpush.msra.mxu0 0.0
    %874 = vmatpush.msra.mxu0 0.0
    %875 = vmatpush.msra.mxu0 0.0
    %876 = vmatpush.msra.mxu0 0.0
    %877 = vmatpush.msra.mxu0 0.0
    %878 = vmatpush.msra.mxu0 0.0
    %879 = vmatpush.msra.mxu0 0.0
    %880 = vmatpush.msra.mxu0 0.0
    %881 = vmatpush.msra.mxu0 0.0
    %882 = vmatpush.msra.mxu0 0.0
    %883 = vmatpush.msra.mxu0 0.0
    %884 = vmatpush.msra.mxu0 0.0
    %885 = vmatpush.msra.mxu0 %v306
    %886 = vmatpush.msra.mxu0 %v305
    %887 = vmatpush.msra.mxu0 %v304
    %888 = vmatpush.msra.mxu0 %v303
    %889 = vmatmul.f32.gmra.mxu0 %v871
    %v890 = vpop.f32.mrf.mxu0
    %v891 = vadd.f32 0.0, %v890
    %892 = vdwg.mxu0
    %893 = vmatpush.msra.mxu0 0.0
    %894 = vmatpush.msra.mxu0 0.0
    %895 = vmatpush.msra.mxu0 0.0
    %896 = vmatpush.msra.mxu0 0.0
    %897 = vmatpush.msra.mxu0 0.0
    %898 = vmatpush.msra.mxu0 0.0
    %899 = vmatpush.msra.mxu0 0.0
    %900 = vmatpush.msra.mxu0 0.0
    %901 = vmatpush.msra.mxu0 0.0
    %902 = vmatpush.msra.mxu0 0.0
    %903 = vmatpush.msra.mxu0 0.0
    %904 = vmatpush.msra.mxu0 0.0
    %905 = vmatpush.msra.mxu0 %v310
    %906 = vmatpush.msra.mxu0 %v309
    %907 = vmatpush.msra.mxu0 %v308
    %908 = vmatpush.msra.mxu0 %v307
    %909 = vmatmul.f32.gmra.mxu0 %v871
    %v910 = vpop.f32.mrf.mxu0
    %v911 = vadd.f32 0.0, %v910
    %912 = vdwg.mxu0
    %v913 = vadd.f32 %v201, %v891
    %v914 = vxor.u32 %v913, 2147483648
    %v915 = vmul.f32 %v914, 1.442695
    %v916 = vpow.pop %v915
    %v917 = vadd.f32 %v916, 1.0
    %v918 = vrcp.pop %v917
    %v919 = vmul.f32 %v917, %v918
    %v920 = vsub.f32 1.0, %v919
    %v921 = vmul.f32 %v918, %v920
    %v922 = vadd.f32 %v918, %v921
    %vm923 = vweird.f32 %v917
    %vm924 = vweird.f32 %v918
    %vm925 = vmor %vm923, %vm924
    %v926 = vsel %vm925, %v918, %v922
    %v927 = vand.u32 2147483647, %v917
    %vm928 = vcmp.eq.f32.partialorder %v927, 8.507059e+37
    %v929 = vand.u32 %v917, 2147483648
    %v930 = vor.u32 1.1754944e-38, %v929
    %v931 = vsel %vm928, %v930, %v926
    %v932 = vmul.f32 1.0, %v931
    %v933 = vadd.f32 %v248, %v911
    %v934 = vxor.u32 %v933, 2147483648
    %v935 = vmul.f32 %v934, 1.442695
    %v936 = vpow.pop %v935
    %v937 = vadd.f32 %v936, 1.0
    %v938 = vrcp.pop %v937
    %v939 = vmul.f32 %v937, %v938
    %v940 = vsub.f32 1.0, %v939
    %v941 = vmul.f32 %v938, %v940
    %v942 = vadd.f32 %v938, %v941
    %vm943 = vweird.f32 %v937
    %vm944 = vweird.f32 %v938
    %vm945 = vmor %vm943, %vm944
    %v946 = vsel %vm945, %v938, %v942
    %v947 = vand.u32 2147483647, %v937
    %vm948 = vcmp.eq.f32.partialorder %v947, 8.507059e+37
    %v949 = vand.u32 %v937, 2147483648
    %v950 = vor.u32 1.1754944e-38, %v949
    %v951 = vsel %vm948, %v950, %v946
    %v952 = vmul.f32 1.0, %v951
    %953 = vmatpush.msra.mxu0 0.0
    %954 = vmatpush.msra.mxu0 0.0
    %955 = vmatpush.msra.mxu0 0.0
    %956 = vmatpush.msra.mxu0 0.0
    %957 = vmatpush.msra.mxu0 0.0
    %958 = vmatpush.msra.mxu0 0.0
    %959 = vmatpush.msra.mxu0 0.0
    %960 = vmatpush.msra.mxu0 0.0
    %961 = vmatpush.msra.mxu0 0.0
    %962 = vmatpush.msra.mxu0 0.0
    %963 = vmatpush.msra.mxu0 0.0
    %964 = vmatpush.msra.mxu0 0.0
    %965 = vmatpush.msra.mxu0 %v314
    %966 = vmatpush.msra.mxu0 %v313
    %967 = vmatpush.msra.mxu0 %v312
    %968 = vmatpush.msra.mxu0 %v311
    %969 = vmatmul.f32.gmra.mxu0 %v871
    %v970 = vpop.f32.mrf.mxu0
    %v971 = vadd.f32 %v401, %v970
    %972 = vdwg.mxu0
    %v973 = vmul.f32 %v932, %v971
    %v974 = vadd.f32 %v295, %v973
    %v975 = vtanh.pop %v974
    %v976 = vsub.f32 1.0, %v952
    %v977 = vmul.f32 %v976, %v975
    %v978 = vmul.f32 %v952, %v869
    %v979 = vadd.f32 %v977, %v978
    %v981 = vsel %vm316, %v979, 0
    %983 = vmatpush.msra.mxu0 0.0
    %984 = vmatpush.msra.mxu0 0.0
    %985 = vmatpush.msra.mxu0 0.0
    %986 = vmatpush.msra.mxu0 0.0
    %987 = vmatpush.msra.mxu0 0.0
    %988 = vmatpush.msra.mxu0 0.0
    %989 = vmatpush.msra.mxu0 0.0
    %990 = vmatpush.msra.mxu0 0.0
    %991 = vmatpush.msra.mxu0 0.0
    %992 = vmatpush.msra.mxu0 0.0
    %993 = vmatpush.msra.mxu0 0.0
    %994 = vmatpush.msra.mxu0 0.0
    %995 = vmatpush.msra.mxu0 %v306
    %996 = vmatpush.msra.mxu0 %v305
    %997 = vmatpush.msra.mxu0 %v304
    %998 = vmatpush.msra.mxu0 %v303
    %999 = vmatmul.f32.gmra.mxu0 %v981
    %v1000 = vpop.f32.mrf.mxu0
    %v1001 = vadd.f32 0.0, %v1000
    %1002 = vdwg.mxu0
    %1003 = vmatpush.msra.mxu0 0.0
    %1004 = vmatpush.msra.mxu0 0.0
    %1005 = vmatpush.msra.mxu0 0.0
    %1006 = vmatpush.msra.mxu0 0.0
    %1007 = vmatpush.msra.mxu0 0.0
    %1008 = vmatpush.msra.mxu0 0.0
    %1009 = vmatpush.msra.mxu0 0.0
    %1010 = vmatpush.msra.mxu0 0.0
    %1011 = vmatpush.msra.mxu0 0.0
    %1012 = vmatpush.msra.mxu0 0.0
    %1013 = vmatpush.msra.mxu0 0.0
    %1014 = vmatpush.msra.mxu0 0.0
    %1015 = vmatpush.msra.mxu0 %v310
    %1016 = vmatpush.msra.mxu0 %v309
    %1017 = vmatpush.msra.mxu0 %v308
    %1018 = vmatpush.msra.mxu0 %v307
    %1019 = vmatmul.f32.gmra.mxu0 %v981
    %v1020 = vpop.f32.mrf.mxu0
    %v1021 = vadd.f32 0.0, %v1020
    %1022 = vdwg.mxu0
    %v1023 = vadd.f32 %v204, %v1001
    %v1024 = vxor.u32 %v1023, 2147483648
    %v1025 = vmul.f32 %v1024, 1.442695
    %v1026 = vpow.pop %v1025
    %v1027 = vadd.f32 %v1026, 1.0
    %v1028 = vrcp.pop %v1027
    %v1029 = vmul.f32 %v1027, %v1028
    %v1030 = vsub.f32 1.0, %v1029
    %v1031 = vmul.f32 %v1028, %v1030
    %v1032 = vadd.f32 %v1028, %v1031
    %vm1033 = vweird.f32 %v1027
    %vm1034 = vweird.f32 %v1028
    %vm1035 = vmor %vm1033, %vm1034
    %v1036 = vsel %vm1035, %v1028, %v1032
    %v1037 = vand.u32 2147483647, %v1027
    %vm1038 = vcmp.eq.f32.partialorder %v1037, 8.507059e+37
    %v1039 = vand.u32 %v1027, 2147483648
    %v1040 = vor.u32 1.1754944e-38, %v1039
    %v1041 = vsel %vm1038, %v1040, %v1036
    %v1042 = vmul.f32 1.0, %v1041
    %v1043 = vadd.f32 %v251, %v1021
    %v1044 = vxor.u32 %v1043, 2147483648
    %v1045 = vmul.f32 %v1044, 1.442695
    %v1046 = vpow.pop %v1045
    %v1047 = vadd.f32 %v1046, 1.0
    %v1048 = vrcp.pop %v1047
    %v1049 = vmul.f32 %v1047, %v1048
    %v1050 = vsub.f32 1.0, %v1049
    %v1051 = vmul.f32 %v1048, %v1050
    %v1052 = vadd.f32 %v1048, %v1051
    %vm1053 = vweird.f32 %v1047
    %vm1054 = vweird.f32 %v1048
    %vm1055 = vmor %vm1053, %vm1054
    %v1056 = vsel %vm1055, %v1048, %v1052
    %v1057 = vand.u32 2147483647, %v1047
    %vm1058 = vcmp.eq.f32.partialorder %v1057, 8.507059e+37
    %v1059 = vand.u32 %v1047, 2147483648
    %v1060 = vor.u32 1.1754944e-38, %v1059
    %v1061 = vsel %vm1058, %v1060, %v1056
    %v1062 = vmul.f32 1.0, %v1061
    %1063 = vmatpush.msra.mxu0 0.0
    %1064 = vmatpush.msra.mxu0 0.0
    %1065 = vmatpush.msra.mxu0 0.0
    %1066 = vmatpush.msra.mxu0 0.0
    %1067 = vmatpush.msra.mxu0 0.0
    %1068 = vmatpush.msra.mxu0 0.0
    %1069 = vmatpush.msra.mxu0 0.0
    %1070 = vmatpush.msra.mxu0 0.0
    %1071 = vmatpush.msra.mxu0 0.0
    %1072 = vmatpush.msra.mxu0 0.0
    %1073 = vmatpush.msra.mxu0 0.0
    %1074 = vmatpush.msra.mxu0 0.0
    %1075 = vmatpush.msra.mxu0 %v314
    %1076 = vmatpush.msra.mxu0 %v313
    %1077 = vmatpush.msra.mxu0 %v312
    %1078 = vmatpush.msra.mxu0 %v311
    %1079 = vmatmul.f32.gmra.mxu0 %v981
    %v1080 = vpop.f32.mrf.mxu0
    %v1081 = vadd.f32 %v401, %v1080
    %1082 = vdwg.mxu0
    %v1083 = vmul.f32 %v1042, %v1081
    %v1084 = vadd.f32 %v298, %v1083
    %v1085 = vtanh.pop %v1084
    %v1086 = vsub.f32 1.0, %v1062
    %v1087 = vmul.f32 %v1086, %v1085
    %v1088 = vmul.f32 %v1062, %v979
    %v1089 = vadd.f32 %v1087, %v1088
    %v1091 = vsel %vm316, %v1089, 0
    %1093 = vmatpush.msra.mxu0 0.0
    %1094 = vmatpush.msra.mxu0 0.0
    %1095 = vmatpush.msra.mxu0 0.0
    %1096 = vmatpush.msra.mxu0 0.0
    %1097 = vmatpush.msra.mxu0 0.0
    %1098 = vmatpush.msra.mxu0 0.0
    %1099 = vmatpush.msra.mxu0 0.0
    %1100 = vmatpush.msra.mxu0 0.0
    %1101 = vmatpush.msra.mxu0 0.0
    %1102 = vmatpush.msra.mxu0 0.0
    %1103 = vmatpush.msra.mxu0 0.0
    %1104 = vmatpush.msra.mxu0 0.0
    %1105 = vmatpush.msra.mxu0 %v306
    %1106 = vmatpush.msra.mxu0 %v305
    %1107 = vmatpush.msra.mxu0 %v304
    %1108 = vmatpush.msra.mxu0 %v303
    %1109 = vmatmul.f32.gmra.mxu0 %v1091
    %v1110 = vpop.f32.mrf.mxu0
    %v1111 = vadd.f32 0.0, %v1110
    %1112 = vdwg.mxu0
    %1113 = vmatpush.msra.mxu0 0.0
    %1114 = vmatpush.msra.mxu0 0.0
    %1115 = vmatpush.msra.mxu0 0.0
    %1116 = vmatpush.msra.mxu0 0.0
    %1117 = vmatpush.msra.mxu0 0.0
    %1118 = vmatpush.msra.mxu0 0.0
    %1119 = vmatpush.msra.mxu0 0.0
    %1120 = vmatpush.msra.mxu0 0.0
    %1121 = vmatpush.msra.mxu0 0.0
    %1122 = vmatpush.msra.mxu0 0.0
    %1123 = vmatpush.msra.mxu0 0.0
    %1124 = vmatpush.msra.mxu0 0.0
    %1125 = vmatpush.msra.mxu0 %v310
    %1126 = vmatpush.msra.mxu0 %v309
    %1127 = vmatpush.msra.mxu0 %v308
    %1128 = vmatpush.msra.mxu0 %v307
    %1129 = vmatmul.f32.gmra.mxu0 %v1091
    %v1130 = vpop.f32.mrf.mxu0
    %v1131 = vadd.f32 0.0, %v1130
    %1132 = vdwg.mxu0
    %v1133 = vadd.f32 %v207, %v1111
    %v1134 = vxor.u32 %v1133, 2147483648
    %v1135 = vmul.f32 %v1134, 1.442695
    %v1136 = vpow.pop %v1135
    %v1137 = vadd.f32 %v1136, 1.0
    %v1138 = vrcp.pop %v1137
    %v1139 = vmul.f32 %v1137, %v1138
    %v1140 = vsub.f32 1.0, %v1139
    %v1141 = vmul.f32 %v1138, %v1140
    %v1142 = vadd.f32 %v1138, %v1141
    %vm1143 = vweird.f32 %v1137
    %vm1144 = vweird.f32 %v1138
    %vm1145 = vmor %vm1143, %vm1144
    %v1146 = vsel %vm1145, %v1138, %v1142
    %v1147 = vand.u32 2147483647, %v1137
    %vm1148 = vcmp.eq.f32.partialorder %v1147, 8.507059e+37
    %v1149 = vand.u32 %v1137, 2147483648
    %v1150 = vor.u32 1.1754944e-38, %v1149
    %v1151 = vsel %vm1148, %v1150, %v1146
    %v1152 = vmul.f32 1.0, %v1151
    %v1153 = vadd.f32 %v254, %v1131
    %v1154 = vxor.u32 %v1153, 2147483648
    %v1155 = vmul.f32 %v1154, 1.442695
    %v1156 = vpow.pop %v1155
    %v1157 = vadd.f32 %v1156, 1.0
    %v1158 = vrcp.pop %v1157
    %v1159 = vmul.f32 %v1157, %v1158
    %v1160 = vsub.f32 1.0, %v1159
    %v1161 = vmul.f32 %v1158, %v1160
    %v1162 = vadd.f32 %v1158, %v1161
    %vm1163 = vweird.f32 %v1157
    %vm1164 = vweird.f32 %v1158
    %vm1165 = vmor %vm1163, %vm1164
    %v1166 = vsel %vm1165, %v1158, %v1162
    %v1167 = vand.u32 2147483647, %v1157
    %vm1168 = vcmp.eq.f32.partialorder %v1167, 8.507059e+37
    %v1169 = vand.u32 %v1157, 2147483648
    %v1170 = vor.u32 1.1754944e-38, %v1169
    %v1171 = vsel %vm1168, %v1170, %v1166
    %v1172 = vmul.f32 1.0, %v1171
    %1173 = vmatpush.msra.mxu0 0.0
    %1174 = vmatpush.msra.mxu0 0.0
    %1175 = vmatpush.msra.mxu0 0.0
    %1176 = vmatpush.msra.mxu0 0.0
    %1177 = vmatpush.msra.mxu0 0.0
    %1178 = vmatpush.msra.mxu0 0.0
    %1179 = vmatpush.msra.mxu0 0.0
    %1180 = vmatpush.msra.mxu0 0.0
    %1181 = vmatpush.msra.mxu0 0.0
    %1182 = vmatpush.msra.mxu0 0.0
    %1183 = vmatpush.msra.mxu0 0.0
    %1184 = vmatpush.msra.mxu0 0.0
    %1185 = vmatpush.msra.mxu0 %v314
    %1186 = vmatpush.msra.mxu0 %v313
    %1187 = vmatpush.msra.mxu0 %v312
    %1188 = vmatpush.msra.mxu0 %v311
    %1189 = vmatmul.f32.gmra.mxu0 %v1091
    %v1190 = vpop.f32.mrf.mxu0
    %v1191 = vadd.f32 %v401, %v1190
    %1192 = vdwg.mxu0
    %v1193 = vmul.f32 %v1152, %v1191
    %v1194 = vadd.f32 %v301, %v1193
    %v1195 = vtanh.pop %v1194
    %v1196 = vsub.f32 1.0, %v1172
    %v1197 = vmul.f32 %v1196, %v1195
    %v1198 = vmul.f32 %v1172, %v1089
    %v1199 = vadd.f32 %v1197, %v1198
    %v1200 = vld [vmem:[#allocation8] sm:$0xff]
    %v1201 = vld [vmem:[#allocation8 + $0x8] sm:$0xff]
    %v1202 = vld [vmem:[#allocation8 + $0x10] sm:$0xff]
    %v1203 = vld [vmem:[#allocation8 + $0x18] sm:$0xff]
    %v1204 = vld [vmem:[%s12] sm:$0x1]
    %v1206 = vperm.slane %v1204, 0
    %v1209 = vsel %vm316, %v1199, 0
    %1211 = vmatpush.msra.mxu0 0.0
    %1212 = vmatpush.msra.mxu0 0.0
    %1213 = vmatpush.msra.mxu0 0.0
    %1214 = vmatpush.msra.mxu0 0.0
    %1215 = vmatpush.msra.mxu0 0.0
    %1216 = vmatpush.msra.mxu0 0.0
    %1217 = vmatpush.msra.mxu0 0.0
    %1218 = vmatpush.msra.mxu0 0.0
    %1219 = vmatpush.msra.mxu0 0.0
    %1220 = vmatpush.msra.mxu0 0.0
    %1221 = vmatpush.msra.mxu0 0.0
    %1222 = vmatpush.msra.mxu0 0.0
    %1223 = vmatpush.msra.mxu0 %v1203
    %1224 = vmatpush.msra.mxu0 %v1202
    %1225 = vmatpush.msra.mxu0 %v1201
    %1226 = vmatpush.msra.mxu0 %v1200
    %1227 = vmatmul.f32.gmra.mxu0 %v1209
    %v1228 = vpop.f32.mrf.mxu0
    %v1229 = vadd.f32 %v1206, %v1228
    %1230 = vdwg.mxu0
    %v1231 = vld [vmem:[#allocation10] sm:$0xff]
    %v1232 = vld [vmem:[#allocation10 + $0x8] sm:$0xff]
    %v1233 = vld [vmem:[#allocation10 + $0x10] sm:$0xff]
    %v1234 = vld [vmem:[#allocation10 + $0x18] sm:$0xff]
    %v1235 = vld [vmem:[#allocation10 + $0x20] sm:$0xff]
    %v1236 = vld [vmem:[#allocation10 + $0x28] sm:$0xff]
    %v1237 = vld [vmem:[#allocation10 + $0x30] sm:$0xff]
    %v1238 = vld [vmem:[#allocation10 + $0x38] sm:$0xff]
    %v1239 = vld [vmem:[#allocation10 + $0x40] sm:$0xff]
    %v1240 = vld [vmem:[#allocation10 + $0x48] sm:$0xff]
    %v1241 = vld [vmem:[#allocation10 + $0x50] sm:$0xff]
    %v1242 = vld [vmem:[#allocation10 + $0x58] sm:$0xff]
    %v1243 = vld [vmem:[#allocation10 + $0x60] sm:$0xff]
    %v1244 = vld [vmem:[#allocation10 + $0x68] sm:$0xff]
    %v1245 = vld [vmem:[#allocation10 + $0x70] sm:$0xff]
    %v1246 = vld [vmem:[#allocation10 + $0x78] sm:$0xff]
    %v1247 = vld [vmem:[%s14] sm:$0x1]
    %v1249 = vperm.slane %v1247, 0
    %1251 = vmatpush.msra.mxu0 %v1246
    %1252 = vmatpush.msra.mxu0 %v1245
    %1253 = vmatpush.msra.mxu0 %v1244
    %1254 = vmatpush.msra.mxu0 %v1243
    %1255 = vmatpush.msra.mxu0 %v1242
    %1256 = vmatpush.msra.mxu0 %v1241
    %1257 = vmatpush.msra.mxu0 %v1240
    %1258 = vmatpush.msra.mxu0 %v1239
    %1259 = vmatpush.msra.mxu0 %v1238
    %1260 = vmatpush.msra.mxu0 %v1237
    %1261 = vmatpush.msra.mxu0 %v1236
    %1262 = vmatpush.msra.mxu0 %v1235
    %1263 = vmatpush.msra.mxu0 %v1234
    %1264 = vmatpush.msra.mxu0 %v1233
    %1265 = vmatpush.msra.mxu0 %v1232
    %1266 = vmatpush.msra.mxu0 %v1231
    %1267 = vmatmul.f32.gmra.mxu0 %v1229
    %v1268 = vpop.f32.mrf.mxu0
    %v1269 = vadd.f32 %v1249, %v1268
    %1270 = vdwg.mxu0
    %v1271 = vxor.u32 %v1269, 2147483648
    %v1272 = vmul.f32 %v1271, 1.442695
    %v1273 = vpow.pop %v1272
    %v1274 = vadd.f32 %v1273, 1.0
    %v1275 = vrcp.pop %v1274
    %v1276 = vmul.f32 %v1274, %v1275
    %v1277 = vsub.f32 1.0, %v1276
    %v1278 = vmul.f32 %v1275, %v1277
    %v1279 = vadd.f32 %v1275, %v1278
    %vm1280 = vweird.f32 %v1274
    %vm1281 = vweird.f32 %v1275
    %vm1282 = vmor %vm1280, %vm1281
    %v1283 = vsel %vm1282, %v1275, %v1279
    %v1284 = vand.u32 2147483647, %v1274
    %vm1285 = vcmp.eq.f32.partialorder %v1284, 8.507059e+37
    %v1286 = vand.u32 %v1274, 2147483648
    %v1287 = vor.u32 1.1754944e-38, %v1286
    %v1288 = vsel %vm1285, %v1287, %v1283
    %v1289 = vmul.f32 1.0, %v1288
    %1290 = vst [vmem:[#allocation11] sm:$0xff] %v1289
    // Predicated region
    $region82: #{tpu_custom_call.1} parent=1 // pred_check
      _
    $region83: #{tpu_custom_call.1} parent=1 // pred_check_branch
      %1292 = sbr.rel (0) target = $region85
    $region84: #{tpu_custom_call.1} parent=1 // pred_region
      %1294 = vsyncadd [#allocation4], 0
      %s1296 = sshll.u32 [#allocation11], 4
      %s1297 = int_to_ptr.vmem [resolvable:$true] %s1296
      %s1298 = sshll.u32 %s15, 4
      %s1299 = int_to_ptr.hbm [resolvable:$true] %s1298
      %1301 = dma.vmem_to_hbm [thread:$0]  %s1297, 128, %s1299, [#allocation4]
    $region85: #{tpu_custom_call.1} parent=1 // pred_fallthru
      _
    // Predicated region
    $region86: #{tpu_custom_call.1} parent=1 // pred_check
      _
    $region87: #{tpu_custom_call.1} parent=1 // pred_check_branch
      %1303 = sbr.rel (0) target = $region89
    $region88: #{tpu_custom_call.1} parent=1 // pred_region
      %1305 = dma.done [#allocation4], 128
    $region89: #{tpu_custom_call.1} parent=1 // pred_fallthru
      _
    %1306 = vsyncpa [#allocation3], 1
    %1307 = vsyncpa [#allocation6], 1
    %1308 = vsyncpa [#allocation9], 1
    %1309 = vsyncpa [#allocation4], 1

</llo_original>
